<compile_context>
chip_gen: v7x
topology: tpu7x:2x2x1
jax: 0.10.0
libtpu: 0.0.40
codegen_flags: <defaults>
</compile_context>

<pallas_src>
import jax
import jax.numpy as jnp
from jax.experimental import pallas as pl
from jax.experimental.pallas import tpu as pltpu

# ----------------------------- problem sizes -------------------------------
BATCH = 8      # batch_size
DIM = 32       # state dimension
HIDDEN = 64    # hidden width of the ODE dynamics MLP
N_STEPS = 10   # fixed RK4 steps between t[0] and t[-1]


# ------------------------------- kernel ------------------------------------
def _make_ode_rk4_kernel(batch: int, dim: int, hidden: int, n_steps: int):
    """Unrolled RK4 integration kernel carrying the hidden pre-activation."""

    def kernel(x_ref, w1_ref, b1_ref, w2d6_ref, b2tot_ref,
               w21h_ref, w21d_ref, w216_ref, b2w1h_ref, b2w1d_ref, o_ref):
        # Everything lives as full-array VMEM blocks; load once into vregs.
        x = x_ref[...]                       # [B, D]  f32 initial condition
        w1 = w1_ref[...]                     # [D, H]  f32
        w2_dt6 = w2d6_ref[...]               # [H, D]  f32  (= (dt/6) * W2)
        w21_h = w21h_ref[...]                # [H, H]  bf16 (= 0.5*dt * W2@W1)
        w21_d = w21d_ref[...]                # [H, H]  bf16 (=     dt * W2@W1)
        w21_6 = w216_ref[...]                # [H, H]  bf16 (= (dt/6)* W2@W1)

        # Bias broadcasts hoisted out of the unrolled loop (plain VPU adds
        # inside the steps instead of repeated sublane broadcasts).
        b1 = jnp.broadcast_to(b1_ref[...], (batch, hidden))         # [B, H]
        b2w1_h = jnp.broadcast_to(b2w1h_ref[...], (batch, hidden))  # 0.5dt*b2@W1
        b2w1_d = jnp.broadcast_to(b2w1d_ref[...], (batch, hidden))  #    dt*b2@W1
        b2_tot = jnp.broadcast_to(b2tot_ref[...], (batch, dim))     # n*dt*b2

        bf16 = jnp.bfloat16

        def mm(z, w_bf16):
            # bf16 operands, f32 accumulation on the MXU.
            return jnp.dot(z.astype(bf16), w_bf16,
                           preferred_element_type=jnp.float32)

        # Initial hidden-space pre-activation: u0 = x @ W1 + b1  (f32, once).
        u = jnp.dot(x, w1, preferred_element_type=jnp.float32) + b1   # [B, H]
        s_total = jnp.zeros((batch, hidden), jnp.float32)

        # Fully unrolled time loop (n_steps small & static).
        for _ in range(n_steps):
            # Off-critical-path sums, available as soon as u is.
            u_h = u + b2w1_h          # = u + 0.5*dt*b2@W1
            u_d = u + b2w1_d          # = u +     dt*b2@W1
            # Four stages; pre-activation of stage i is u + c_i*dt*(k_{i-1}@W1)
            # expressed through W21 = W2@W1 (scalings folded into the weights).
            z1 = jnp.tanh(u)
            z2 = jnp.tanh(u_h + mm(z1, w21_h))
            z3 = jnp.tanh(u_h + mm(z2, w21_h))
            z4 = jnp.tanh(u_d + mm(z3, w21_d))
            s = z1 + 2.0 * (z2 + z3) + z4          # k1+2k2+2k3+k4 = s@W2 + 6*b2
            s_total = s_total + s                  # VPU, off the serial chain
            # u_{n+1} = u_n + (dt/6)*s@W21 + dt*b2@W1
            u = u_d + mm(s, w21_6)

        # Telescoped state update, done once:
        #   h_N = x0 + (dt/6)*(sum_i S_i)@W2 + n_steps*dt*b2
        o_ref[...] = (x
                      + jnp.dot(s_total, w2_dt6,
                                preferred_element_type=jnp.float32)
                      + b2_tot)

    return kernel


# --------------------------- parameter prep ---------------------------------
def prepare_dynamics(params, t=(0.0, 1.0), n_steps=N_STEPS):
    """One-time pre-fusion of the dynamics-MLP weights (do at param-setup time,
    not per forward call): W21 = W2@W1, b2@W1, RK4 scalings, bf16 casts."""
    t0, t1 = float(t[0]), float(t[-1])
    dt = (t1 - t0) / float(n_steps)
    half_dt, dt6 = 0.5 * dt, dt / 6.0

    d, h = params["w1"].shape
    w1 = params["w1"].astype(jnp.float32)                  # [d, h]
    b1 = params["b1"].reshape(1, h).astype(jnp.float32)    # [1, h]
    w2 = params["w2"].astype(jnp.float32)                  # [h, d]
    b2 = params["b2"].reshape(1, d).astype(jnp.float32)    # [1, d]

    w21 = jnp.dot(w2, w1, preferred_element_type=jnp.float32)    # [h, h]
    b2w1 = jnp.dot(b2, w1, preferred_element_type=jnp.float32)   # [1, h]

    return {
        "n_steps": n_steps,
        "dim": d,
        "hidden": h,
        "w1": w1,
        "b1": b1,
        "w2_dt6": dt6 * w2,                                   # f32 [h, d]
        "b2_total": (n_steps * dt) * b2,                       # f32 [1, d]
        "w21_h": (half_dt * w21).astype(jnp.bfloat16),         # bf16 [h, h]
        "w21_d": (dt * w21).astype(jnp.bfloat16),              # bf16 [h, h]
        "w21_6": (dt6 * w21).astype(jnp.bfloat16),             # bf16 [h, h]
        "b2w1_h": half_dt * b2w1,                              # f32 [1, h]
        "b2w1_d": dt * b2w1,                                   # f32 [1, h]
    }


# ------------------------------- wrapper ------------------------------------
def neural_ode_forward(x, prepped):
    """Integrate dx/dt = f(x) with fixed-step RK4. x: [batch, dim] f32."""
    b, d = x.shape
    h = prepped["hidden"]
    kernel = _make_ode_rk4_kernel(b, d, h, prepped["n_steps"])

    # Single-program call: ~25 KiB of operands as full-array VMEM blocks;
    # no grid / tiling / pipelining needed at this size.
    vmem = pl.BlockSpec(memory_space=pltpu.MemorySpace.VMEM)
    return pl.pallas_call(
        kernel,
        out_shape=jax.ShapeDtypeStruct((b, d), jnp.float32),
        in_specs=[vmem] * 10,
        out_specs=vmem,
    )(x.astype(jnp.float32),
      prepped["w1"], prepped["b1"],
      prepped["w2_dt6"], prepped["b2_total"],
      prepped["w21_h"], prepped["w21_d"], prepped["w21_6"],
      prepped["b2w1_h"], prepped["b2w1_d"])


# Pure-JAX reference (straightforward f32 8-matmul RK4, same math).
def _reference(x, params, t=(0.0, 1.0), n_steps=N_STEPS):
    dt = (float(t[-1]) - float(t[0])) / float(n_steps)
    w1, b1 = params["w1"], params["b1"].reshape(1, -1)
    w2, b2 = params["w2"], params["b2"].reshape(1, -1)

    def f(h):
        return jnp.tanh(h @ w1 + b1) @ w2 + b2

    h = x
    for _ in range(n_steps):
        k1 = f(h)
        k2 = f(h + 0.5 * dt * k1)
        k3 = f(h + 0.5 * dt * k2)
        k4 = f(h + dt * k3)
        h = h + (dt / 6.0) * (k1 + 2.0 * k2 + 2.0 * k3 + k4)
    return h


if __name__ == "__main__":
    key = jax.random.PRNGKey(0)
    kx, k1, k2, k3, k4 = jax.random.split(key, 5)

    # Deterministic synthetic parameters for the dynamics MLP.
    params = {
        "w1": 0.1 * jax.random.normal(k1, (DIM, HIDDEN), dtype=jnp.float32),
        "b1": 0.1 * jax.random.normal(k2, (HIDDEN,), dtype=jnp.float32),
        "w2": 0.1 * jax.random.normal(k3, (HIDDEN, DIM), dtype=jnp.float32),
        "b2": 0.1 * jax.random.normal(k4, (DIM,), dtype=jnp.float32),
    }
    x0 = jax.random.normal(kx, (BATCH, DIM), dtype=jnp.float32)

    prepped = prepare_dynamics(params, t=(0.0, 1.0), n_steps=N_STEPS)
    out = neural_ode_forward(x0, prepped)
    out = jax.block_until_ready(out)

    ref = _reference(x0, params)
    assert out.shape == (BATCH, DIM)
    # Tolerance accounts for (a) exact-in-real-arithmetic reassociation of the
    # W2@W1 pre-fusion / telescoped update and (b) bf16 operands on the
    # inner-loop W21 matmuls (state & accumulation stay f32, so drift over the
    # 10 RK4 steps stays well inside this bound; measured error ~1e-4).
    assert jnp.allclose(out, ref, rtol=1e-2, atol=1e-3), "mismatch vs reference"

    print("KERNEL_OK")
</pallas_src>

<mosaic_0001>
module attributes {stable_mosaic.version = 11 : i64} {
  func.func @kernel(%arg0: memref<8x32xf32, #tpu.memory_space<vmem>>, %arg1: memref<32x64xf32, #tpu.memory_space<vmem>>, %arg2: memref<1x64xf32, #tpu.memory_space<vmem>>, %arg3: memref<64x32xf32, #tpu.memory_space<vmem>>, %arg4: memref<1x32xf32, #tpu.memory_space<vmem>>, %arg5: memref<64x64xbf16, #tpu.memory_space<vmem>>, %arg6: memref<64x64xbf16, #tpu.memory_space<vmem>>, %arg7: memref<64x64xbf16, #tpu.memory_space<vmem>>, %arg8: memref<1x64xf32, #tpu.memory_space<vmem>>, %arg9: memref<1x64xf32, #tpu.memory_space<vmem>>, %arg10: memref<8x32xf32, #tpu.memory_space<vmem>>) attributes {dimension_semantics = [], scalar_prefetch = 0 : i64, scratch_operands = 0 : i64, tpu.core_type = #tpu.core_type<tc>} {
    %c0 = arith.constant 0 : index
    %c0_0 = arith.constant 0 : index
    %0 = vector.load %arg0[%c0, %c0_0] : memref<8x32xf32, #tpu.memory_space<vmem>>, vector<8x32xf32>
    %c0_1 = arith.constant 0 : index
    %c0_2 = arith.constant 0 : index
    %1 = vector.load %arg1[%c0_1, %c0_2] : memref<32x64xf32, #tpu.memory_space<vmem>>, vector<32x64xf32>
    %c0_3 = arith.constant 0 : index
    %c0_4 = arith.constant 0 : index
    %2 = vector.load %arg3[%c0_3, %c0_4] : memref<64x32xf32, #tpu.memory_space<vmem>>, vector<64x32xf32>
    %c0_5 = arith.constant 0 : index
    %c0_6 = arith.constant 0 : index
    %3 = vector.load %arg5[%c0_5, %c0_6] : memref<64x64xbf16, #tpu.memory_space<vmem>>, vector<64x64xbf16>
    %c0_7 = arith.constant 0 : index
    %c0_8 = arith.constant 0 : index
    %4 = vector.load %arg6[%c0_7, %c0_8] : memref<64x64xbf16, #tpu.memory_space<vmem>>, vector<64x64xbf16>
    %c0_9 = arith.constant 0 : index
    %c0_10 = arith.constant 0 : index
    %5 = vector.load %arg7[%c0_9, %c0_10] : memref<64x64xbf16, #tpu.memory_space<vmem>>, vector<64x64xbf16>
    %c0_11 = arith.constant 0 : index
    %c0_12 = arith.constant 0 : index
    %6 = vector.load %arg2[%c0_11, %c0_12] : memref<1x64xf32, #tpu.memory_space<vmem>>, vector<1x64xf32>
    %7 = vector.shape_cast %6 : vector<1x64xf32> to vector<1x64xf32>
    %8 = vector.broadcast %7 : vector<1x64xf32> to vector<8x64xf32>
    %c0_13 = arith.constant 0 : index
    %c0_14 = arith.constant 0 : index
    %9 = vector.load %arg8[%c0_13, %c0_14] : memref<1x64xf32, #tpu.memory_space<vmem>>, vector<1x64xf32>
    %10 = vector.shape_cast %9 : vector<1x64xf32> to vector<1x64xf32>
    %11 = vector.broadcast %10 : vector<1x64xf32> to vector<8x64xf32>
    %c0_15 = arith.constant 0 : index
    %c0_16 = arith.constant 0 : index
    %12 = vector.load %arg9[%c0_15, %c0_16] : memref<1x64xf32, #tpu.memory_space<vmem>>, vector<1x64xf32>
    %13 = vector.shape_cast %12 : vector<1x64xf32> to vector<1x64xf32>
    %14 = vector.broadcast %13 : vector<1x64xf32> to vector<8x64xf32>
    %c0_17 = arith.constant 0 : index
    %c0_18 = arith.constant 0 : index
    %15 = vector.load %arg4[%c0_17, %c0_18] : memref<1x32xf32, #tpu.memory_space<vmem>>, vector<1x32xf32>
    %16 = vector.shape_cast %15 : vector<1x32xf32> to vector<1x32xf32>
    %17 = vector.broadcast %16 : vector<1x32xf32> to vector<8x32xf32>
    %cst = arith.constant dense<0.000000e+00> : vector<8x64xf32>
    %18 = tpu.matmul %0, %1, %cst {dimension_numbers = #tpu.dot_dimension_numbers<[1], [0], [0], [1], [0, 0, 1, 1], [], []>} : vector<8x32xf32>, vector<32x64xf32>, vector<8x64xf32> -> vector<8x64xf32>
    %19 = arith.addf %18, %8 : vector<8x64xf32>
    %cst_19 = arith.constant 0.000000e+00 : f32
    %20 = vector.broadcast %cst_19 : f32 to vector<8x64xf32>
    %21 = arith.addf %19, %11 : vector<8x64xf32>
    %22 = arith.addf %19, %14 : vector<8x64xf32>
    %23 = math.tanh %19 : vector<8x64xf32>
    %24 = arith.truncf %23 : vector<8x64xf32> to vector<8x64xbf16>
    %cst_20 = arith.constant dense<0.000000e+00> : vector<8x64xf32>
    %25 = tpu.matmul %24, %3, %cst_20 {dimension_numbers = #tpu.dot_dimension_numbers<[1], [0], [0], [1], [0, 0, 1, 1], [], []>} : vector<8x64xbf16>, vector<64x64xbf16>, vector<8x64xf32> -> vector<8x64xf32>
    %26 = arith.addf %21, %25 : vector<8x64xf32>
    %27 = math.tanh %26 : vector<8x64xf32>
    %28 = arith.truncf %27 : vector<8x64xf32> to vector<8x64xbf16>
    %cst_21 = arith.constant dense<0.000000e+00> : vector<8x64xf32>
    %29 = tpu.matmul %28, %3, %cst_21 {dimension_numbers = #tpu.dot_dimension_numbers<[1], [0], [0], [1], [0, 0, 1, 1], [], []>} : vector<8x64xbf16>, vector<64x64xbf16>, vector<8x64xf32> -> vector<8x64xf32>
    %30 = arith.addf %21, %29 : vector<8x64xf32>
    %31 = math.tanh %30 : vector<8x64xf32>
    %32 = arith.truncf %31 : vector<8x64xf32> to vector<8x64xbf16>
    %cst_22 = arith.constant dense<0.000000e+00> : vector<8x64xf32>
    %33 = tpu.matmul %32, %4, %cst_22 {dimension_numbers = #tpu.dot_dimension_numbers<[1], [0], [0], [1], [0, 0, 1, 1], [], []>} : vector<8x64xbf16>, vector<64x64xbf16>, vector<8x64xf32> -> vector<8x64xf32>
    %34 = arith.addf %22, %33 : vector<8x64xf32>
    %35 = math.tanh %34 : vector<8x64xf32>
    %36 = arith.addf %27, %31 : vector<8x64xf32>
    %cst_23 = arith.constant 2.000000e+00 : f32
    %37 = vector.broadcast %cst_23 : f32 to vector<8x64xf32>
    %38 = arith.mulf %37, %36 : vector<8x64xf32>
    %39 = arith.addf %23, %38 : vector<8x64xf32>
    %40 = arith.addf %39, %35 : vector<8x64xf32>
    %41 = arith.addf %20, %40 : vector<8x64xf32>
    %42 = arith.truncf %40 : vector<8x64xf32> to vector<8x64xbf16>
    %cst_24 = arith.constant dense<0.000000e+00> : vector<8x64xf32>
    %43 = tpu.matmul %42, %5, %cst_24 {dimension_numbers = #tpu.dot_dimension_numbers<[1], [0], [0], [1], [0, 0, 1, 1], [], []>} : vector<8x64xbf16>, vector<64x64xbf16>, vector<8x64xf32> -> vector<8x64xf32>
    %44 = arith.addf %22, %43 : vector<8x64xf32>
    %45 = arith.addf %44, %11 : vector<8x64xf32>
    %46 = arith.addf %44, %14 : vector<8x64xf32>
    %47 = math.tanh %44 : vector<8x64xf32>
    %48 = arith.truncf %47 : vector<8x64xf32> to vector<8x64xbf16>
    %cst_25 = arith.constant dense<0.000000e+00> : vector<8x64xf32>
    %49 = tpu.matmul %48, %3, %cst_25 {dimension_numbers = #tpu.dot_dimension_numbers<[1], [0], [0], [1], [0, 0, 1, 1], [], []>} : vector<8x64xbf16>, vector<64x64xbf16>, vector<8x64xf32> -> vector<8x64xf32>
    %50 = arith.addf %45, %49 : vector<8x64xf32>
    %51 = math.tanh %50 : vector<8x64xf32>
    %52 = arith.truncf %51 : vector<8x64xf32> to vector<8x64xbf16>
    %cst_26 = arith.constant dense<0.000000e+00> : vector<8x64xf32>
    %53 = tpu.matmul %52, %3, %cst_26 {dimension_numbers = #tpu.dot_dimension_numbers<[1], [0], [0], [1], [0, 0, 1, 1], [], []>} : vector<8x64xbf16>, vector<64x64xbf16>, vector<8x64xf32> -> vector<8x64xf32>
    %54 = arith.addf %45, %53 : vector<8x64xf32>
    %55 = math.tanh %54 : vector<8x64xf32>
    %56 = arith.truncf %55 : vector<8x64xf32> to vector<8x64xbf16>
    %cst_27 = arith.constant dense<0.000000e+00> : vector<8x64xf32>
    %57 = tpu.matmul %56, %4, %cst_27 {dimension_numbers = #tpu.dot_dimension_numbers<[1], [0], [0], [1], [0, 0, 1, 1], [], []>} : vector<8x64xbf16>, vector<64x64xbf16>, vector<8x64xf32> -> vector<8x64xf32>
    %58 = arith.addf %46, %57 : vector<8x64xf32>
    %59 = math.tanh %58 : vector<8x64xf32>
    %60 = arith.addf %51, %55 : vector<8x64xf32>
    %cst_28 = arith.constant 2.000000e+00 : f32
    %61 = vector.broadcast %cst_28 : f32 to vector<8x64xf32>
    %62 = arith.mulf %61, %60 : vector<8x64xf32>
    %63 = arith.addf %47, %62 : vector<8x64xf32>
    %64 = arith.addf %63, %59 : vector<8x64xf32>
    %65 = arith.addf %41, %64 : vector<8x64xf32>
    %66 = arith.truncf %64 : vector<8x64xf32> to vector<8x64xbf16>
    %cst_29 = arith.constant dense<0.000000e+00> : vector<8x64xf32>
    %67 = tpu.matmul %66, %5, %cst_29 {dimension_numbers = #tpu.dot_dimension_numbers<[1], [0], [0], [1], [0, 0, 1, 1], [], []>} : vector<8x64xbf16>, vector<64x64xbf16>, vector<8x64xf32> -> vector<8x64xf32>
    %68 = arith.addf %46, %67 : vector<8x64xf32>
    %69 = arith.addf %68, %11 : vector<8x64xf32>
    %70 = arith.addf %68, %14 : vector<8x64xf32>
    %71 = math.tanh %68 : vector<8x64xf32>
    %72 = arith.truncf %71 : vector<8x64xf32> to vector<8x64xbf16>
    %cst_30 = arith.constant dense<0.000000e+00> : vector<8x64xf32>
    %73 = tpu.matmul %72, %3, %cst_30 {dimension_numbers = #tpu.dot_dimension_numbers<[1], [0], [0], [1], [0, 0, 1, 1], [], []>} : vector<8x64xbf16>, vector<64x64xbf16>, vector<8x64xf32> -> vector<8x64xf32>
    %74 = arith.addf %69, %73 : vector<8x64xf32>
    %75 = math.tanh %74 : vector<8x64xf32>
    %76 = arith.truncf %75 : vector<8x64xf32> to vector<8x64xbf16>
    %cst_31 = arith.constant dense<0.000000e+00> : vector<8x64xf32>
    %77 = tpu.matmul %76, %3, %cst_31 {dimension_numbers = #tpu.dot_dimension_numbers<[1], [0], [0], [1], [0, 0, 1, 1], [], []>} : vector<8x64xbf16>, vector<64x64xbf16>, vector<8x64xf32> -> vector<8x64xf32>
    %78 = arith.addf %69, %77 : vector<8x64xf32>
    %79 = math.tanh %78 : vector<8x64xf32>
    %80 = arith.truncf %79 : vector<8x64xf32> to vector<8x64xbf16>
    %cst_32 = arith.constant dense<0.000000e+00> : vector<8x64xf32>
    %81 = tpu.matmul %80, %4, %cst_32 {dimension_numbers = #tpu.dot_dimension_numbers<[1], [0], [0], [1], [0, 0, 1, 1], [], []>} : vector<8x64xbf16>, vector<64x64xbf16>, vector<8x64xf32> -> vector<8x64xf32>
    %82 = arith.addf %70, %81 : vector<8x64xf32>
    %83 = math.tanh %82 : vector<8x64xf32>
    %84 = arith.addf %75, %79 : vector<8x64xf32>
    %cst_33 = arith.constant 2.000000e+00 : f32
    %85 = vector.broadcast %cst_33 : f32 to vector<8x64xf32>
    %86 = arith.mulf %85, %84 : vector<8x64xf32>
    %87 = arith.addf %71, %86 : vector<8x64xf32>
    %88 = arith.addf %87, %83 : vector<8x64xf32>
    %89 = arith.addf %65, %88 : vector<8x64xf32>
    %90 = arith.truncf %88 : vector<8x64xf32> to vector<8x64xbf16>
    %cst_34 = arith.constant dense<0.000000e+00> : vector<8x64xf32>
    %91 = tpu.matmul %90, %5, %cst_34 {dimension_numbers = #tpu.dot_dimension_numbers<[1], [0], [0], [1], [0, 0, 1, 1], [], []>} : vector<8x64xbf16>, vector<64x64xbf16>, vector<8x64xf32> -> vector<8x64xf32>
    %92 = arith.addf %70, %91 : vector<8x64xf32>
    %93 = arith.addf %92, %11 : vector<8x64xf32>
    %94 = arith.addf %92, %14 : vector<8x64xf32>
    %95 = math.tanh %92 : vector<8x64xf32>
    %96 = arith.truncf %95 : vector<8x64xf32> to vector<8x64xbf16>
    %cst_35 = arith.constant dense<0.000000e+00> : vector<8x64xf32>
    %97 = tpu.matmul %96, %3, %cst_35 {dimension_numbers = #tpu.dot_dimension_numbers<[1], [0], [0], [1], [0, 0, 1, 1], [], []>} : vector<8x64xbf16>, vector<64x64xbf16>, vector<8x64xf32> -> vector<8x64xf32>
    %98 = arith.addf %93, %97 : vector<8x64xf32>
    %99 = math.tanh %98 : vector<8x64xf32>
    %100 = arith.truncf %99 : vector<8x64xf32> to vector<8x64xbf16>
    %cst_36 = arith.constant dense<0.000000e+00> : vector<8x64xf32>
    %101 = tpu.matmul %100, %3, %cst_36 {dimension_numbers = #tpu.dot_dimension_numbers<[1], [0], [0], [1], [0, 0, 1, 1], [], []>} : vector<8x64xbf16>, vector<64x64xbf16>, vector<8x64xf32> -> vector<8x64xf32>
    %102 = arith.addf %93, %101 : vector<8x64xf32>
    %103 = math.tanh %102 : vector<8x64xf32>
    %104 = arith.truncf %103 : vector<8x64xf32> to vector<8x64xbf16>
    %cst_37 = arith.constant dense<0.000000e+00> : vector<8x64xf32>
    %105 = tpu.matmul %104, %4, %cst_37 {dimension_numbers = #tpu.dot_dimension_numbers<[1], [0], [0], [1], [0, 0, 1, 1], [], []>} : vector<8x64xbf16>, vector<64x64xbf16>, vector<8x64xf32> -> vector<8x64xf32>
    %106 = arith.addf %94, %105 : vector<8x64xf32>
    %107 = math.tanh %106 : vector<8x64xf32>
    %108 = arith.addf %99, %103 : vector<8x64xf32>
    %cst_38 = arith.constant 2.000000e+00 : f32
    %109 = vector.broadcast %cst_38 : f32 to vector<8x64xf32>
    %110 = arith.mulf %109, %108 : vector<8x64xf32>
    %111 = arith.addf %95, %110 : vector<8x64xf32>
    %112 = arith.addf %111, %107 : vector<8x64xf32>
    %113 = arith.addf %89, %112 : vector<8x64xf32>
    %114 = arith.truncf %112 : vector<8x64xf32> to vector<8x64xbf16>
    %cst_39 = arith.constant dense<0.000000e+00> : vector<8x64xf32>
    %115 = tpu.matmul %114, %5, %cst_39 {dimension_numbers = #tpu.dot_dimension_numbers<[1], [0], [0], [1], [0, 0, 1, 1], [], []>} : vector<8x64xbf16>, vector<64x64xbf16>, vector<8x64xf32> -> vector<8x64xf32>
    %116 = arith.addf %94, %115 : vector<8x64xf32>
    %117 = arith.addf %116, %11 : vector<8x64xf32>
    %118 = arith.addf %116, %14 : vector<8x64xf32>
    %119 = math.tanh %116 : vector<8x64xf32>
    %120 = arith.truncf %119 : vector<8x64xf32> to vector<8x64xbf16>
    %cst_40 = arith.constant dense<0.000000e+00> : vector<8x64xf32>
    %121 = tpu.matmul %120, %3, %cst_40 {dimension_numbers = #tpu.dot_dimension_numbers<[1], [0], [0], [1], [0, 0, 1, 1], [], []>} : vector<8x64xbf16>, vector<64x64xbf16>, vector<8x64xf32> -> vector<8x64xf32>
    %122 = arith.addf %117, %121 : vector<8x64xf32>
    %123 = math.tanh %122 : vector<8x64xf32>
    %124 = arith.truncf %123 : vector<8x64xf32> to vector<8x64xbf16>
    %cst_41 = arith.constant dense<0.000000e+00> : vector<8x64xf32>
    %125 = tpu.matmul %124, %3, %cst_41 {dimension_numbers = #tpu.dot_dimension_numbers<[1], [0], [0], [1], [0, 0, 1, 1], [], []>} : vector<8x64xbf16>, vector<64x64xbf16>, vector<8x64xf32> -> vector<8x64xf32>
    %126 = arith.addf %117, %125 : vector<8x64xf32>
    %127 = math.tanh %126 : vector<8x64xf32>
    %128 = arith.truncf %127 : vector<8x64xf32> to vector<8x64xbf16>
    %cst_42 = arith.constant dense<0.000000e+00> : vector<8x64xf32>
    %129 = tpu.matmul %128, %4, %cst_42 {dimension_numbers = #tpu.dot_dimension_numbers<[1], [0], [0], [1], [0, 0, 1, 1], [], []>} : vector<8x64xbf16>, vector<64x64xbf16>, vector<8x64xf32> -> vector<8x64xf32>
    %130 = arith.addf %118, %129 : vector<8x64xf32>
    %131 = math.tanh %130 : vector<8x64xf32>
    %132 = arith.addf %123, %127 : vector<8x64xf32>
    %cst_43 = arith.constant 2.000000e+00 : f32
    %133 = vector.broadcast %cst_43 : f32 to vector<8x64xf32>
    %134 = arith.mulf %133, %132 : vector<8x64xf32>
    %135 = arith.addf %119, %134 : vector<8x64xf32>
    %136 = arith.addf %135, %131 : vector<8x64xf32>
    %137 = arith.addf %113, %136 : vector<8x64xf32>
    %138 = arith.truncf %136 : vector<8x64xf32> to vector<8x64xbf16>
    %cst_44 = arith.constant dense<0.000000e+00> : vector<8x64xf32>
    %139 = tpu.matmul %138, %5, %cst_44 {dimension_numbers = #tpu.dot_dimension_numbers<[1], [0], [0], [1], [0, 0, 1, 1], [], []>} : vector<8x64xbf16>, vector<64x64xbf16>, vector<8x64xf32> -> vector<8x64xf32>
    %140 = arith.addf %118, %139 : vector<8x64xf32>
    %141 = arith.addf %140, %11 : vector<8x64xf32>
    %142 = arith.addf %140, %14 : vector<8x64xf32>
    %143 = math.tanh %140 : vector<8x64xf32>
    %144 = arith.truncf %143 : vector<8x64xf32> to vector<8x64xbf16>
    %cst_45 = arith.constant dense<0.000000e+00> : vector<8x64xf32>
    %145 = tpu.matmul %144, %3, %cst_45 {dimension_numbers = #tpu.dot_dimension_numbers<[1], [0], [0], [1], [0, 0, 1, 1], [], []>} : vector<8x64xbf16>, vector<64x64xbf16>, vector<8x64xf32> -> vector<8x64xf32>
    %146 = arith.addf %141, %145 : vector<8x64xf32>
    %147 = math.tanh %146 : vector<8x64xf32>
    %148 = arith.truncf %147 : vector<8x64xf32> to vector<8x64xbf16>
    %cst_46 = arith.constant dense<0.000000e+00> : vector<8x64xf32>
    %149 = tpu.matmul %148, %3, %cst_46 {dimension_numbers = #tpu.dot_dimension_numbers<[1], [0], [0], [1], [0, 0, 1, 1], [], []>} : vector<8x64xbf16>, vector<64x64xbf16>, vector<8x64xf32> -> vector<8x64xf32>
    %150 = arith.addf %141, %149 : vector<8x64xf32>
    %151 = math.tanh %150 : vector<8x64xf32>
    %152 = arith.truncf %151 : vector<8x64xf32> to vector<8x64xbf16>
    %cst_47 = arith.constant dense<0.000000e+00> : vector<8x64xf32>
    %153 = tpu.matmul %152, %4, %cst_47 {dimension_numbers = #tpu.dot_dimension_numbers<[1], [0], [0], [1], [0, 0, 1, 1], [], []>} : vector<8x64xbf16>, vector<64x64xbf16>, vector<8x64xf32> -> vector<8x64xf32>
    %154 = arith.addf %142, %153 : vector<8x64xf32>
    %155 = math.tanh %154 : vector<8x64xf32>
    %156 = arith.addf %147, %151 : vector<8x64xf32>
    %cst_48 = arith.constant 2.000000e+00 : f32
    %157 = vector.broadcast %cst_48 : f32 to vector<8x64xf32>
    %158 = arith.mulf %157, %156 : vector<8x64xf32>
    %159 = arith.addf %143, %158 : vector<8x64xf32>
    %160 = arith.addf %159, %155 : vector<8x64xf32>
    %161 = arith.addf %137, %160 : vector<8x64xf32>
    %162 = arith.truncf %160 : vector<8x64xf32> to vector<8x64xbf16>
    %cst_49 = arith.constant dense<0.000000e+00> : vector<8x64xf32>
    %163 = tpu.matmul %162, %5, %cst_49 {dimension_numbers = #tpu.dot_dimension_numbers<[1], [0], [0], [1], [0, 0, 1, 1], [], []>} : vector<8x64xbf16>, vector<64x64xbf16>, vector<8x64xf32> -> vector<8x64xf32>
    %164 = arith.addf %142, %163 : vector<8x64xf32>
    %165 = arith.addf %164, %11 : vector<8x64xf32>
    %166 = arith.addf %164, %14 : vector<8x64xf32>
    %167 = math.tanh %164 : vector<8x64xf32>
    %168 = arith.truncf %167 : vector<8x64xf32> to vector<8x64xbf16>
    %cst_50 = arith.constant dense<0.000000e+00> : vector<8x64xf32>
    %169 = tpu.matmul %168, %3, %cst_50 {dimension_numbers = #tpu.dot_dimension_numbers<[1], [0], [0], [1], [0, 0, 1, 1], [], []>} : vector<8x64xbf16>, vector<64x64xbf16>, vector<8x64xf32> -> vector<8x64xf32>
    %170 = arith.addf %165, %169 : vector<8x64xf32>
    %171 = math.tanh %170 : vector<8x64xf32>
    %172 = arith.truncf %171 : vector<8x64xf32> to vector<8x64xbf16>
    %cst_51 = arith.constant dense<0.000000e+00> : vector<8x64xf32>
    %173 = tpu.matmul %172, %3, %cst_51 {dimension_numbers = #tpu.dot_dimension_numbers<[1], [0], [0], [1], [0, 0, 1, 1], [], []>} : vector<8x64xbf16>, vector<64x64xbf16>, vector<8x64xf32> -> vector<8x64xf32>
    %174 = arith.addf %165, %173 : vector<8x64xf32>
    %175 = math.tanh %174 : vector<8x64xf32>
    %176 = arith.truncf %175 : vector<8x64xf32> to vector<8x64xbf16>
    %cst_52 = arith.constant dense<0.000000e+00> : vector<8x64xf32>
    %177 = tpu.matmul %176, %4, %cst_52 {dimension_numbers = #tpu.dot_dimension_numbers<[1], [0], [0], [1], [0, 0, 1, 1], [], []>} : vector<8x64xbf16>, vector<64x64xbf16>, vector<8x64xf32> -> vector<8x64xf32>
    %178 = arith.addf %166, %177 : vector<8x64xf32>
    %179 = math.tanh %178 : vector<8x64xf32>
    %180 = arith.addf %171, %175 : vector<8x64xf32>
    %cst_53 = arith.constant 2.000000e+00 : f32
    %181 = vector.broadcast %cst_53 : f32 to vector<8x64xf32>
    %182 = arith.mulf %181, %180 : vector<8x64xf32>
    %183 = arith.addf %167, %182 : vector<8x64xf32>
    %184 = arith.addf %183, %179 : vector<8x64xf32>
    %185 = arith.addf %161, %184 : vector<8x64xf32>
    %186 = arith.truncf %184 : vector<8x64xf32> to vector<8x64xbf16>
    %cst_54 = arith.constant dense<0.000000e+00> : vector<8x64xf32>
    %187 = tpu.matmul %186, %5, %cst_54 {dimension_numbers = #tpu.dot_dimension_numbers<[1], [0], [0], [1], [0, 0, 1, 1], [], []>} : vector<8x64xbf16>, vector<64x64xbf16>, vector<8x64xf32> -> vector<8x64xf32>
    %188 = arith.addf %166, %187 : vector<8x64xf32>
    %189 = arith.addf %188, %11 : vector<8x64xf32>
    %190 = arith.addf %188, %14 : vector<8x64xf32>
    %191 = math.tanh %188 : vector<8x64xf32>
    %192 = arith.truncf %191 : vector<8x64xf32> to vector<8x64xbf16>
    %cst_55 = arith.constant dense<0.000000e+00> : vector<8x64xf32>
    %193 = tpu.matmul %192, %3, %cst_55 {dimension_numbers = #tpu.dot_dimension_numbers<[1], [0], [0], [1], [0, 0, 1, 1], [], []>} : vector<8x64xbf16>, vector<64x64xbf16>, vector<8x64xf32> -> vector<8x64xf32>
    %194 = arith.addf %189, %193 : vector<8x64xf32>
    %195 = math.tanh %194 : vector<8x64xf32>
    %196 = arith.truncf %195 : vector<8x64xf32> to vector<8x64xbf16>
    %cst_56 = arith.constant dense<0.000000e+00> : vector<8x64xf32>
    %197 = tpu.matmul %196, %3, %cst_56 {dimension_numbers = #tpu.dot_dimension_numbers<[1], [0], [0], [1], [0, 0, 1, 1], [], []>} : vector<8x64xbf16>, vector<64x64xbf16>, vector<8x64xf32> -> vector<8x64xf32>
    %198 = arith.addf %189, %197 : vector<8x64xf32>
    %199 = math.tanh %198 : vector<8x64xf32>
    %200 = arith.truncf %199 : vector<8x64xf32> to vector<8x64xbf16>
    %cst_57 = arith.constant dense<0.000000e+00> : vector<8x64xf32>
    %201 = tpu.matmul %200, %4, %cst_57 {dimension_numbers = #tpu.dot_dimension_numbers<[1], [0], [0], [1], [0, 0, 1, 1], [], []>} : vector<8x64xbf16>, vector<64x64xbf16>, vector<8x64xf32> -> vector<8x64xf32>
    %202 = arith.addf %190, %201 : vector<8x64xf32>
    %203 = math.tanh %202 : vector<8x64xf32>
    %204 = arith.addf %195, %199 : vector<8x64xf32>
    %cst_58 = arith.constant 2.000000e+00 : f32
    %205 = vector.broadcast %cst_58 : f32 to vector<8x64xf32>
    %206 = arith.mulf %205, %204 : vector<8x64xf32>
    %207 = arith.addf %191, %206 : vector<8x64xf32>
    %208 = arith.addf %207, %203 : vector<8x64xf32>
    %209 = arith.addf %185, %208 : vector<8x64xf32>
    %210 = arith.truncf %208 : vector<8x64xf32> to vector<8x64xbf16>
    %cst_59 = arith.constant dense<0.000000e+00> : vector<8x64xf32>
    %211 = tpu.matmul %210, %5, %cst_59 {dimension_numbers = #tpu.dot_dimension_numbers<[1], [0], [0], [1], [0, 0, 1, 1], [], []>} : vector<8x64xbf16>, vector<64x64xbf16>, vector<8x64xf32> -> vector<8x64xf32>
    %212 = arith.addf %190, %211 : vector<8x64xf32>
    %213 = arith.addf %212, %11 : vector<8x64xf32>
    %214 = arith.addf %212, %14 : vector<8x64xf32>
    %215 = math.tanh %212 : vector<8x64xf32>
    %216 = arith.truncf %215 : vector<8x64xf32> to vector<8x64xbf16>
    %cst_60 = arith.constant dense<0.000000e+00> : vector<8x64xf32>
    %217 = tpu.matmul %216, %3, %cst_60 {dimension_numbers = #tpu.dot_dimension_numbers<[1], [0], [0], [1], [0, 0, 1, 1], [], []>} : vector<8x64xbf16>, vector<64x64xbf16>, vector<8x64xf32> -> vector<8x64xf32>
    %218 = arith.addf %213, %217 : vector<8x64xf32>
    %219 = math.tanh %218 : vector<8x64xf32>
    %220 = arith.truncf %219 : vector<8x64xf32> to vector<8x64xbf16>
    %cst_61 = arith.constant dense<0.000000e+00> : vector<8x64xf32>
    %221 = tpu.matmul %220, %3, %cst_61 {dimension_numbers = #tpu.dot_dimension_numbers<[1], [0], [0], [1], [0, 0, 1, 1], [], []>} : vector<8x64xbf16>, vector<64x64xbf16>, vector<8x64xf32> -> vector<8x64xf32>
    %222 = arith.addf %213, %221 : vector<8x64xf32>
    %223 = math.tanh %222 : vector<8x64xf32>
    %224 = arith.truncf %223 : vector<8x64xf32> to vector<8x64xbf16>
    %cst_62 = arith.constant dense<0.000000e+00> : vector<8x64xf32>
    %225 = tpu.matmul %224, %4, %cst_62 {dimension_numbers = #tpu.dot_dimension_numbers<[1], [0], [0], [1], [0, 0, 1, 1], [], []>} : vector<8x64xbf16>, vector<64x64xbf16>, vector<8x64xf32> -> vector<8x64xf32>
    %226 = arith.addf %214, %225 : vector<8x64xf32>
    %227 = math.tanh %226 : vector<8x64xf32>
    %228 = arith.addf %219, %223 : vector<8x64xf32>
    %cst_63 = arith.constant 2.000000e+00 : f32
    %229 = vector.broadcast %cst_63 : f32 to vector<8x64xf32>
    %230 = arith.mulf %229, %228 : vector<8x64xf32>
    %231 = arith.addf %215, %230 : vector<8x64xf32>
    %232 = arith.addf %231, %227 : vector<8x64xf32>
    %233 = arith.addf %209, %232 : vector<8x64xf32>
    %234 = arith.truncf %232 : vector<8x64xf32> to vector<8x64xbf16>
    %cst_64 = arith.constant dense<0.000000e+00> : vector<8x64xf32>
    %235 = tpu.matmul %234, %5, %cst_64 {dimension_numbers = #tpu.dot_dimension_numbers<[1], [0], [0], [1], [0, 0, 1, 1], [], []>} : vector<8x64xbf16>, vector<64x64xbf16>, vector<8x64xf32> -> vector<8x64xf32>
    %236 = arith.addf %214, %235 : vector<8x64xf32>
    %237 = arith.addf %236, %11 : vector<8x64xf32>
    %238 = arith.addf %236, %14 : vector<8x64xf32>
    %239 = math.tanh %236 : vector<8x64xf32>
    %240 = arith.truncf %239 : vector<8x64xf32> to vector<8x64xbf16>
    %cst_65 = arith.constant dense<0.000000e+00> : vector<8x64xf32>
    %241 = tpu.matmul %240, %3, %cst_65 {dimension_numbers = #tpu.dot_dimension_numbers<[1], [0], [0], [1], [0, 0, 1, 1], [], []>} : vector<8x64xbf16>, vector<64x64xbf16>, vector<8x64xf32> -> vector<8x64xf32>
    %242 = arith.addf %237, %241 : vector<8x64xf32>
    %243 = math.tanh %242 : vector<8x64xf32>
    %244 = arith.truncf %243 : vector<8x64xf32> to vector<8x64xbf16>
    %cst_66 = arith.constant dense<0.000000e+00> : vector<8x64xf32>
    %245 = tpu.matmul %244, %3, %cst_66 {dimension_numbers = #tpu.dot_dimension_numbers<[1], [0], [0], [1], [0, 0, 1, 1], [], []>} : vector<8x64xbf16>, vector<64x64xbf16>, vector<8x64xf32> -> vector<8x64xf32>
    %246 = arith.addf %237, %245 : vector<8x64xf32>
    %247 = math.tanh %246 : vector<8x64xf32>
    %248 = arith.truncf %247 : vector<8x64xf32> to vector<8x64xbf16>
    %cst_67 = arith.constant dense<0.000000e+00> : vector<8x64xf32>
    %249 = tpu.matmul %248, %4, %cst_67 {dimension_numbers = #tpu.dot_dimension_numbers<[1], [0], [0], [1], [0, 0, 1, 1], [], []>} : vector<8x64xbf16>, vector<64x64xbf16>, vector<8x64xf32> -> vector<8x64xf32>
    %250 = arith.addf %238, %249 : vector<8x64xf32>
    %251 = math.tanh %250 : vector<8x64xf32>
    %252 = arith.addf %243, %247 : vector<8x64xf32>
    %cst_68 = arith.constant 2.000000e+00 : f32
    %253 = vector.broadcast %cst_68 : f32 to vector<8x64xf32>
    %254 = arith.mulf %253, %252 : vector<8x64xf32>
    %255 = arith.addf %239, %254 : vector<8x64xf32>
    %256 = arith.addf %255, %251 : vector<8x64xf32>
    %257 = arith.addf %233, %256 : vector<8x64xf32>
    %cst_69 = arith.constant dense<0.000000e+00> : vector<8x32xf32>
    %258 = tpu.matmul %257, %2, %cst_69 {dimension_numbers = #tpu.dot_dimension_numbers<[1], [0], [0], [1], [0, 0, 1, 1], [], []>} : vector<8x64xf32>, vector<64x32xf32>, vector<8x32xf32> -> vector<8x32xf32>
    %259 = arith.addf %0, %258 : vector<8x32xf32>
    %260 = arith.addf %259, %17 : vector<8x32xf32>
    %c0_70 = arith.constant 0 : index
    %c0_71 = arith.constant 0 : index
    %261 = vector.load %arg10[%c0_70, %c0_71] : memref<8x32xf32, #tpu.memory_space<vmem>>, vector<8x32xf32>
    tpu.vector_store %arg10[%c0_70, %c0_71], %260 {strides = array<i32>} : memref<8x32xf32, #tpu.memory_space<vmem>>, vector<8x32xf32>,
    return
  }
}

</mosaic_0001>

<llo_original>
// kernel: tpu_custom_call.1
$region0: #{tpu_custom_call.1}
  #allocation0 [shape = 'u32[]', space=smem, size = 0x4, offset = 0x4, fixed_abs, tag = 'smem constant byte address 0x4 - core index']
  #allocation1 [shape = 'u32[144,128]{1,0:T(1,128)}', space=vmem, size = 0x12000, scoped, tag = 'internal scratch']
  %s0 = inlined_call_operand.hbm [shape: f32[8,32], index: 0, kind: input, shape index: {}]
  %s1 = inlined_call_operand.vmem [shape: f32[32,64], index: 1, kind: input, shape index: {}]
  %s2 = inlined_call_operand.vmem [shape: f32[1,64], index: 2, kind: input, shape index: {}]
  %s3 = inlined_call_operand.vmem [shape: f32[64,32], index: 3, kind: input, shape index: {}]
  %s4 = inlined_call_operand.vmem [shape: f32[1,32], index: 4, kind: input, shape index: {}]
  %s5 = inlined_call_operand.vmem [shape: bf16[64,64], index: 5, kind: input, shape index: {}]
  %s6 = inlined_call_operand.vmem [shape: bf16[64,64], index: 6, kind: input, shape index: {}]
  %s7 = inlined_call_operand.hbm [shape: bf16[64,64], index: 7, kind: input, shape index: {}]
  %s8 = inlined_call_operand.vmem [shape: f32[1,64], index: 8, kind: input, shape index: {}]
  %s9 = inlined_call_operand.vmem [shape: f32[1,64], index: 9, kind: input, shape index: {}]
  %s10 = inlined_call_operand.hbm [shape: f32[8,32], index: 10, kind: output, shape index: {}]
  %s11 = sld [smem:[#allocation0]]
  $region58: #{tpu_custom_call.1} parent=0
    _
  %s13 = ssub.s32 1, %s11
  %s14 = scalar_select 0, %s13, %s11
  $region1: #{tpu_custom_call.1} parent=0
    #allocation2 [shape = 'u8[4096]{0}', space=vmem, size = 0x1000, scoped, tag = 'input window, operand 0, single buffered']
    #allocation3 [shape = 's32[1]{0}', space=sflag, size = 0x4, scoped, tag = 'scoped memory for tpu_custom_call.1']
    #allocation4 [shape = 's32[1]{0}', space=sflag, size = 0x4, scoped, tag = 'scoped memory for tpu_custom_call.1']
    #allocation5 [shape = 'u8[16384]{0}', space=vmem, size = 0x4000, scoped, tag = 'input window, operand 7, single buffered']
    #allocation6 [shape = 's32[1]{0}', space=sflag, size = 0x4, scoped, tag = 'scoped memory for tpu_custom_call.1']
    #allocation7 [shape = 'u8[4096]{0}', space=vmem, size = 0x1000, scoped, tag = 'output window, operand 0, single buffered']
    %15 = vsyncpa [#allocation3], 0
    %16 = vsyncpa [#allocation6], 0
    %17 = vsyncpa [#allocation4], 0
    // Predicated region
    $region2: #{tpu_custom_call.1} parent=1 // pred_check
      _
    $region3: #{tpu_custom_call.1} parent=1 // pred_check_branch
      %19 = sbr.rel (0) target = $region5
    $region4: #{tpu_custom_call.1} parent=1 // pred_region
      %s21 = ssub.s32 128, 128
      %22 = vsyncadd [#allocation3], %s21
      %s24 = sshll.u32 [#allocation2], 4
      %s25 = int_to_ptr.vmem [resolvable:$true] %s24
      %27 = dma.hbm_to_vmem [thread:$0]  %s0, 128, %s25, [#allocation3]
    $region5: #{tpu_custom_call.1} parent=1 // pred_fallthru
      _
    // Predicated region
    $region6: #{tpu_custom_call.1} parent=1 // pred_check
      _
    $region7: #{tpu_custom_call.1} parent=1 // pred_check_branch
      %29 = sbr.rel (0) target = $region9
    $region8: #{tpu_custom_call.1} parent=1 // pred_region
      _
    $region9: #{tpu_custom_call.1} parent=1 // pred_fallthru
      _
    // Predicated region
    $region10: #{tpu_custom_call.1} parent=1 // pred_check
      _
    $region11: #{tpu_custom_call.1} parent=1 // pred_check_branch
      %31 = sbr.rel (0) target = $region13
    $region12: #{tpu_custom_call.1} parent=1 // pred_region
      _
    $region13: #{tpu_custom_call.1} parent=1 // pred_fallthru
      _
    // Predicated region
    $region14: #{tpu_custom_call.1} parent=1 // pred_check
      _
    $region15: #{tpu_custom_call.1} parent=1 // pred_check_branch
      %33 = sbr.rel (0) target = $region17
    $region16: #{tpu_custom_call.1} parent=1 // pred_region
      _
    $region17: #{tpu_custom_call.1} parent=1 // pred_fallthru
      _
    // Predicated region
    $region18: #{tpu_custom_call.1} parent=1 // pred_check
      _
    $region19: #{tpu_custom_call.1} parent=1 // pred_check_branch
      %35 = sbr.rel (0) target = $region21
    $region20: #{tpu_custom_call.1} parent=1 // pred_region
      _
    $region21: #{tpu_custom_call.1} parent=1 // pred_fallthru
      _
    // Predicated region
    $region22: #{tpu_custom_call.1} parent=1 // pred_check
      _
    $region23: #{tpu_custom_call.1} parent=1 // pred_check_branch
      %37 = sbr.rel (0) target = $region25
    $region24: #{tpu_custom_call.1} parent=1 // pred_region
      _
    $region25: #{tpu_custom_call.1} parent=1 // pred_fallthru
      _
    // Predicated region
    $region26: #{tpu_custom_call.1} parent=1 // pred_check
      _
    $region27: #{tpu_custom_call.1} parent=1 // pred_check_branch
      %39 = sbr.rel (0) target = $region29
    $region28: #{tpu_custom_call.1} parent=1 // pred_region
      _
    $region29: #{tpu_custom_call.1} parent=1 // pred_fallthru
      _
    // Predicated region
    $region30: #{tpu_custom_call.1} parent=1 // pred_check
      _
    $region31: #{tpu_custom_call.1} parent=1 // pred_check_branch
      %41 = sbr.rel (0) target = $region33
    $region32: #{tpu_custom_call.1} parent=1 // pred_region
      %s43 = ssub.s32 512, 512
      %44 = vsyncadd [#allocation6], %s43
      %s45 = sshll.u32 [#allocation5], 4
      %s46 = int_to_ptr.vmem [resolvable:$true] %s45
      %51 = dma.hbm_to_vmem [thread:$0]  %s7, 512, %s46, [#allocation6], 64, 64, 4
    $region33: #{tpu_custom_call.1} parent=1 // pred_fallthru
      _
    // Predicated region
    $region34: #{tpu_custom_call.1} parent=1 // pred_check
      _
    $region35: #{tpu_custom_call.1} parent=1 // pred_check_branch
      %53 = sbr.rel (0) target = $region37
    $region36: #{tpu_custom_call.1} parent=1 // pred_region
      _
    $region37: #{tpu_custom_call.1} parent=1 // pred_fallthru
      _
    // Predicated region
    $region38: #{tpu_custom_call.1} parent=1 // pred_check
      _
    $region39: #{tpu_custom_call.1} parent=1 // pred_check_branch
      %55 = sbr.rel (0) target = $region41
    $region40: #{tpu_custom_call.1} parent=1 // pred_region
      _
    $region41: #{tpu_custom_call.1} parent=1 // pred_fallthru
      _
    // Predicated region
    $region42: #{tpu_custom_call.1} parent=1 // pred_check
      _
    $region43: #{tpu_custom_call.1} parent=1 // pred_check_branch
      %57 = sbr.rel (0) target = $region45
    $region44: #{tpu_custom_call.1} parent=1 // pred_region
      %58 = dma.done [#allocation3], 128
    $region45: #{tpu_custom_call.1} parent=1 // pred_fallthru
      _
    // Predicated region
    $region46: #{tpu_custom_call.1} parent=1 // pred_check
      _
    $region47: #{tpu_custom_call.1} parent=1 // pred_check_branch
      %60 = sbr.rel (0) target = $region49
    $region48: #{tpu_custom_call.1} parent=1 // pred_region
      %61 = dma.done [#allocation6], 512
    $region49: #{tpu_custom_call.1} parent=1 // pred_fallthru
      _
    %v63 = vld [vmem:[#allocation2] sm:$0xff]
    %v64 = vld [vmem:[%s1] sm:$0xff]
    %v65 = vld [vmem:[%s1 + $0x8] sm:$0xff]
    %v66 = vld [vmem:[%s1 + $0x10] sm:$0xff]
    %v67 = vld [vmem:[%s1 + $0x18] sm:$0xff]
    %v68 = vld [vmem:[%s3] sm:$0xff]
    %v69 = vld [vmem:[%s3 + $0x8] sm:$0xff]
    %v70 = vld [vmem:[%s3 + $0x10] sm:$0xff]
    %v71 = vld [vmem:[%s3 + $0x18] sm:$0xff]
    %v72 = vld [vmem:[%s3 + $0x20] sm:$0xff]
    %v73 = vld [vmem:[%s3 + $0x28] sm:$0xff]
    %v74 = vld [vmem:[%s3 + $0x30] sm:$0xff]
    %v75 = vld [vmem:[%s3 + $0x38] sm:$0xff]
    %v76 = vld [vmem:[%s5] sm:$0xf]
    %v77 = vld [vmem:[%s5 + $0x4] sm:$0xf]
    %v78 = vld [vmem:[%s5 + $0x8] sm:$0xf]
    %v79 = vld [vmem:[%s5 + $0xc] sm:$0xf]
    %v80 = vld [vmem:[%s5 + $0x10] sm:$0xf]
    %v81 = vld [vmem:[%s5 + $0x14] sm:$0xf]
    %v82 = vld [vmem:[%s5 + $0x18] sm:$0xf]
    %v83 = vld [vmem:[%s5 + $0x1c] sm:$0xf]
    %v84 = vld [vmem:[%s6] sm:$0xf]
    %v85 = vld [vmem:[%s6 + $0x4] sm:$0xf]
    %v86 = vld [vmem:[%s6 + $0x8] sm:$0xf]
    %v87 = vld [vmem:[%s6 + $0xc] sm:$0xf]
    %v88 = vld [vmem:[%s6 + $0x10] sm:$0xf]
    %v89 = vld [vmem:[%s6 + $0x14] sm:$0xf]
    %v90 = vld [vmem:[%s6 + $0x18] sm:$0xf]
    %v91 = vld [vmem:[%s6 + $0x1c] sm:$0xf]
    %v92 = vld [vmem:[#allocation5] sm:$0xf]
    %v93 = vld [vmem:[#allocation5 + $0x4] sm:$0xf]
    %v94 = vld [vmem:[#allocation5 + $0x8] sm:$0xf]
    %v95 = vld [vmem:[#allocation5 + $0xc] sm:$0xf]
    %v96 = vld [vmem:[#allocation5 + $0x10] sm:$0xf]
    %v97 = vld [vmem:[#allocation5 + $0x14] sm:$0xf]
    %v98 = vld [vmem:[#allocation5 + $0x18] sm:$0xf]
    %v99 = vld [vmem:[#allocation5 + $0x1c] sm:$0xf]
    %v100 = vld [vmem:[%s2] sm:$0x1]
    %v102 = vlaneseq
    %v103 = vshrl.u32 %v102, 7
    %v104 = vsub.s32 0, %v103
    %v105 = vrot.slane %v100, %v104
    %v107 = vld [vmem:[%s8] sm:$0x1]
    %v109 = vlaneseq
    %v110 = vshrl.u32 %v109, 7
    %v111 = vsub.s32 0, %v110
    %v112 = vrot.slane %v107, %v111
    %v114 = vld [vmem:[%s9] sm:$0x1]
    %v116 = vlaneseq
    %v117 = vshrl.u32 %v116, 7
    %v118 = vsub.s32 0, %v117
    %v119 = vrot.slane %v114, %v118
    %v121 = vld [vmem:[%s4] sm:$0x1]
    %v123 = vlaneseq
    %v124 = vshrl.u32 %v123, 7
    %v125 = vsub.s32 0, %v124
    %v126 = vrot.slane %v121, %v125
    %vm128 = vcmask 261120
    %v130 = vsel %vm128, %v63, 0
    %132 = vmatprep.subr.mxu0 0.0
    %133 = vmatpush1.msra.mxu0 %v64
    %134 = vmatprep.subr.mxu0 0.0
    %135 = vmatpush1.msra.mxu0 %v65
    %136 = vmatprep.subr.mxu0 0.0
    %137 = vmatpush1.msra.mxu0 %v66
    %138 = vmatprep.subr.mxu0 0.0
    %139 = vmatpush1.msra.mxu0 %v67
    %140 = vmatprep.subr.mxu0 0.0
    %141 = vmatpush1.msra.mxu0 0.0
    %142 = vmatprep.subr.mxu0 0.0
    %143 = vmatpush1.msra.mxu0 0.0
    %144 = vmatprep.subr.mxu0 0.0
    %145 = vmatpush1.msra.mxu0 0.0
    %146 = vmatprep.subr.mxu0 0.0
    %147 = vmatpush1.msra.mxu0 0.0
    %148 = vmatprep.subr.mxu0 0.0
    %149 = vmatpush1.msra.mxu0 0.0
    %150 = vmatprep.subr.mxu0 0.0
    %151 = vmatpush1.msra.mxu0 0.0
    %152 = vmatprep.subr.mxu0 0.0
    %153 = vmatpush1.msra.mxu0 0.0
    %154 = vmatprep.subr.mxu0 0.0
    %155 = vmatpush1.msra.mxu0 0.0
    %156 = vmatprep.subr.mxu0 0.0
    %157 = vmatpush1.msra.mxu0 0.0
    %158 = vmatprep.subr.mxu0 0.0
    %159 = vmatpush1.msra.mxu0 0.0
    %160 = vmatprep.subr.mxu0 0.0
    %161 = vmatpush1.msra.mxu0 0.0
    %162 = vmatprep.subr.mxu0 0.0
    %163 = vmatpush1.msra.mxu0 0.0
    %164 = vmatprep.subr.mxu0 0.0
    %165 = vmatpush1.msra.mxu0 0.0
    %166 = vmatprep.subr.mxu0 0.0
    %167 = vmatpush1.msra.mxu0 0.0
    %168 = vmatprep.subr.mxu0 0.0
    %169 = vmatpush1.msra.mxu0 0.0
    %170 = vmatprep.subr.mxu0 0.0
    %171 = vmatpush1.msra.mxu0 0.0
    %172 = vmatprep.subr.mxu0 0.0
    %173 = vmatpush1.msra.mxu0 0.0
    %174 = vmatprep.subr.mxu0 0.0
    %175 = vmatpush1.msra.mxu0 0.0
    %176 = vmatprep.subr.mxu0 0.0
    %177 = vmatpush1.msra.mxu0 0.0
    %178 = vmatprep.subr.mxu0 0.0
    %179 = vmatpush1.msra.mxu0 0.0
    %180 = vmatprep.subr.mxu0 0.0
    %181 = vmatpush1.msra.mxu0 0.0
    %182 = vmatprep.subr.mxu0 0.0
    %183 = vmatpush1.msra.mxu0 0.0
    %184 = vmatprep.subr.mxu0 0.0
    %185 = vmatpush1.msra.mxu0 0.0
    %186 = vmatprep.subr.mxu0 0.0
    %187 = vmatpush1.msra.mxu0 0.0
    %188 = vmatprep.subr.mxu0 0.0
    %189 = vmatpush1.msra.mxu0 0.0
    %190 = vmatprep.subr.mxu0 0.0
    %191 = vmatpush1.msra.mxu0 0.0
    %192 = vmatprep.subr.mxu0 0.0
    %193 = vmatpush1.msra.mxu0 0.0
    %194 = vmatprep.subr.mxu0 0.0
    %195 = vmatpush1.msra.mxu0 0.0
    %196 = vmatprep.mubr.f32.mxu0 0.0
    %197 = vmatmul.mubr.f32.gmra.mrb[0].mxu0 %v130
    %v198 = vpop.f32.mrb[0].mxu0
    %v199 = vadd.f32 %v105, %v198
    %v200 = vpop.f32.mrb[0].mxu0
    %201 = vdwg.mxu0
    %v202 = vadd.f32 %v199, %v112
    %v203 = vadd.f32 %v199, %v119
    %v204 = vtanh.pop %v199
    %v205 = vpack.c.bf16 %v204, %v204
    %v214 = vunpack.c.l.b16 %v76
    %v215 = vunpack.c.l.b16 %v77
    %v216 = vunpack.c.l.b16 %v78
    %v217 = vunpack.c.l.b16 %v79
    %v218 = vunpack.c.l.b16 %v80
    %v219 = vunpack.c.l.b16 %v81
    %v220 = vunpack.c.l.b16 %v82
    %v221 = vunpack.c.l.b16 %v83
    %v222 = vpack.c.b16 %v215, %v214
    %v223 = vpack.c.b16 %v217, %v216
    %v224 = vpack.c.b16 %v219, %v218
    %v225 = vpack.c.b16 %v221, %v220
    %vm230 = vcmask 523264
    %v232 = vsel %vm230, %v205, 0
    %234 = vmatprep.subr.bf16.mxu0 0
    %235 = vmatpush1.bf16.msra.mxu0 %v222
    %236 = vmatprep.subr.bf16.mxu0 0
    %237 = vmatpush1.bf16.msra.mxu0 %v223
    %238 = vmatprep.subr.bf16.mxu0 0
    %239 = vmatpush1.bf16.msra.mxu0 %v224
    %240 = vmatprep.subr.bf16.mxu0 0
    %241 = vmatpush1.bf16.msra.mxu0 %v225
    %242 = vmatprep.subr.bf16.mxu0 0
    %243 = vmatpush1.bf16.msra.mxu0 0
    %244 = vmatprep.subr.bf16.mxu0 0
    %245 = vmatpush1.bf16.msra.mxu0 0
    %246 = vmatprep.subr.bf16.mxu0 0
    %247 = vmatpush1.bf16.msra.mxu0 0
    %248 = vmatprep.subr.bf16.mxu0 0
    %249 = vmatpush1.bf16.msra.mxu0 0
    %250 = vmatprep.subr.bf16.mxu0 0
    %251 = vmatpush1.bf16.msra.mxu0 0
    %252 = vmatprep.subr.bf16.mxu0 0
    %253 = vmatpush1.bf16.msra.mxu0 0
    %254 = vmatprep.subr.bf16.mxu0 0
    %255 = vmatpush1.bf16.msra.mxu0 0
    %256 = vmatprep.subr.bf16.mxu0 0
    %257 = vmatpush1.bf16.msra.mxu0 0
    %258 = vmatprep.subr.bf16.mxu0 0
    %259 = vmatpush1.bf16.msra.mxu0 0
    %260 = vmatprep.subr.bf16.mxu0 0
    %261 = vmatpush1.bf16.msra.mxu0 0
    %262 = vmatprep.subr.bf16.mxu0 0
    %263 = vmatpush1.bf16.msra.mxu0 0
    %264 = vmatprep.subr.bf16.mxu0 0
    %265 = vmatpush1.bf16.msra.mxu0 0
    %266 = vmatprep.mubr.bf16.mxu0 0
    %267 = vmatmul.mubr.bf16.gmra.mrb[0].mxu0 %v232
    %v268 = vpop.f32.mrb[0].mxu0
    %v269 = vadd.f32 0.0, %v268
    %v270 = vpop.f32.mrb[0].mxu0
    %v271 = vpop.f32.mrb[0].mxu0
    %v272 = vpop.f32.mrb[0].mxu0
    %273 = vdwg.mxu0
    %v274 = vadd.f32 %v202, %v269
    %v275 = vtanh.pop %v274
    %v276 = vpack.c.bf16 %v275, %v275
    %v278 = vsel %vm230, %v276, 0
    %280 = vmatprep.subr.bf16.mxu0 0
    %281 = vmatpush1.bf16.msra.mxu0 %v222
    %282 = vmatprep.subr.bf16.mxu0 0
    %283 = vmatpush1.bf16.msra.mxu0 %v223
    %284 = vmatprep.subr.bf16.mxu0 0
    %285 = vmatpush1.bf16.msra.mxu0 %v224
    %286 = vmatprep.subr.bf16.mxu0 0
    %287 = vmatpush1.bf16.msra.mxu0 %v225
    %288 = vmatprep.subr.bf16.mxu0 0
    %289 = vmatpush1.bf16.msra.mxu0 0
    %290 = vmatprep.subr.bf16.mxu0 0
    %291 = vmatpush1.bf16.msra.mxu0 0
    %292 = vmatprep.subr.bf16.mxu0 0
    %293 = vmatpush1.bf16.msra.mxu0 0
    %294 = vmatprep.subr.bf16.mxu0 0
    %295 = vmatpush1.bf16.msra.mxu0 0
    %296 = vmatprep.subr.bf16.mxu0 0
    %297 = vmatpush1.bf16.msra.mxu0 0
    %298 = vmatprep.subr.bf16.mxu0 0
    %299 = vmatpush1.bf16.msra.mxu0 0
    %300 = vmatprep.subr.bf16.mxu0 0
    %301 = vmatpush1.bf16.msra.mxu0 0
    %302 = vmatprep.subr.bf16.mxu0 0
    %303 = vmatpush1.bf16.msra.mxu0 0
    %304 = vmatprep.subr.bf16.mxu0 0
    %305 = vmatpush1.bf16.msra.mxu0 0
    %306 = vmatprep.subr.bf16.mxu0 0
    %307 = vmatpush1.bf16.msra.mxu0 0
    %308 = vmatprep.subr.bf16.mxu0 0
    %309 = vmatpush1.bf16.msra.mxu0 0
    %310 = vmatprep.subr.bf16.mxu0 0
    %311 = vmatpush1.bf16.msra.mxu0 0
    %312 = vmatprep.mubr.bf16.mxu0 0
    %313 = vmatmul.mubr.bf16.gmra.mrb[0].mxu0 %v278
    %v314 = vpop.f32.mrb[0].mxu0
    %v315 = vadd.f32 0.0, %v314
    %v316 = vpop.f32.mrb[0].mxu0
    %v317 = vpop.f32.mrb[0].mxu0
    %v318 = vpop.f32.mrb[0].mxu0
    %319 = vdwg.mxu0
    %v320 = vadd.f32 %v202, %v315
    %v321 = vtanh.pop %v320
    %v322 = vpack.c.bf16 %v321, %v321
    %v331 = vunpack.c.l.b16 %v84
    %v332 = vunpack.c.l.b16 %v85
    %v333 = vunpack.c.l.b16 %v86
    %v334 = vunpack.c.l.b16 %v87
    %v335 = vunpack.c.l.b16 %v88
    %v336 = vunpack.c.l.b16 %v89
    %v337 = vunpack.c.l.b16 %v90
    %v338 = vunpack.c.l.b16 %v91
    %v339 = vpack.c.b16 %v332, %v331
    %v340 = vpack.c.b16 %v334, %v333
    %v341 = vpack.c.b16 %v336, %v335
    %v342 = vpack.c.b16 %v338, %v337
    %v348 = vsel %vm230, %v322, 0
    %350 = vmatprep.subr.bf16.mxu0 0
    %351 = vmatpush1.bf16.msra.mxu0 %v339
    %352 = vmatprep.subr.bf16.mxu0 0
    %353 = vmatpush1.bf16.msra.mxu0 %v340
    %354 = vmatprep.subr.bf16.mxu0 0
    %355 = vmatpush1.bf16.msra.mxu0 %v341
    %356 = vmatprep.subr.bf16.mxu0 0
    %357 = vmatpush1.bf16.msra.mxu0 %v342
    %358 = vmatprep.subr.bf16.mxu0 0
    %359 = vmatpush1.bf16.msra.mxu0 0
    %360 = vmatprep.subr.bf16.mxu0 0
    %361 = vmatpush1.bf16.msra.mxu0 0
    %362 = vmatprep.subr.bf16.mxu0 0
    %363 = vmatpush1.bf16.msra.mxu0 0
    %364 = vmatprep.subr.bf16.mxu0 0
    %365 = vmatpush1.bf16.msra.mxu0 0
    %366 = vmatprep.subr.bf16.mxu0 0
    %367 = vmatpush1.bf16.msra.mxu0 0
    %368 = vmatprep.subr.bf16.mxu0 0
    %369 = vmatpush1.bf16.msra.mxu0 0
    %370 = vmatprep.subr.bf16.mxu0 0
    %371 = vmatpush1.bf16.msra.mxu0 0
    %372 = vmatprep.subr.bf16.mxu0 0
    %373 = vmatpush1.bf16.msra.mxu0 0
    %374 = vmatprep.subr.bf16.mxu0 0
    %375 = vmatpush1.bf16.msra.mxu0 0
    %376 = vmatprep.subr.bf16.mxu0 0
    %377 = vmatpush1.bf16.msra.mxu0 0
    %378 = vmatprep.subr.bf16.mxu0 0
    %379 = vmatpush1.bf16.msra.mxu0 0
    %380 = vmatprep.subr.bf16.mxu0 0
    %381 = vmatpush1.bf16.msra.mxu0 0
    %382 = vmatprep.mubr.bf16.mxu0 0
    %383 = vmatmul.mubr.bf16.gmra.mrb[0].mxu0 %v348
    %v384 = vpop.f32.mrb[0].mxu0
    %v385 = vadd.f32 0.0, %v384
    %v386 = vpop.f32.mrb[0].mxu0
    %v387 = vpop.f32.mrb[0].mxu0
    %v388 = vpop.f32.mrb[0].mxu0
    %389 = vdwg.mxu0
    %v390 = vadd.f32 %v203, %v385
    %v391 = vtanh.pop %v390
    %v392 = vadd.f32 %v275, %v321
    %v393 = vmul.f32 %v392, 2.0
    %v394 = vadd.f32 %v204, %v393
    %v395 = vadd.f32 %v394, %v391
    %v396 = vadd.f32 %v395, 0.0
    %v397 = vpack.c.bf16 %v395, %v395
    %v406 = vunpack.c.l.b16 %v92
    %v407 = vunpack.c.l.b16 %v93
    %v408 = vunpack.c.l.b16 %v94
    %v409 = vunpack.c.l.b16 %v95
    %v410 = vunpack.c.l.b16 %v96
    %v411 = vunpack.c.l.b16 %v97
    %v412 = vunpack.c.l.b16 %v98
    %v413 = vunpack.c.l.b16 %v99
    %v414 = vpack.c.b16 %v407, %v406
    %v415 = vpack.c.b16 %v409, %v408
    %v416 = vpack.c.b16 %v411, %v410
    %v417 = vpack.c.b16 %v413, %v412
    %v423 = vsel %vm230, %v397, 0
    %425 = vmatprep.subr.bf16.mxu0 0
    %426 = vmatpush1.bf16.msra.mxu0 %v414
    %427 = vmatprep.subr.bf16.mxu0 0
    %428 = vmatpush1.bf16.msra.mxu0 %v415
    %429 = vmatprep.subr.bf16.mxu0 0
    %430 = vmatpush1.bf16.msra.mxu0 %v416
    %431 = vmatprep.subr.bf16.mxu0 0
    %432 = vmatpush1.bf16.msra.mxu0 %v417
    %433 = vmatprep.subr.bf16.mxu0 0
    %434 = vmatpush1.bf16.msra.mxu0 0
    %435 = vmatprep.subr.bf16.mxu0 0
    %436 = vmatpush1.bf16.msra.mxu0 0
    %437 = vmatprep.subr.bf16.mxu0 0
    %438 = vmatpush1.bf16.msra.mxu0 0
    %439 = vmatprep.subr.bf16.mxu0 0
    %440 = vmatpush1.bf16.msra.mxu0 0
    %441 = vmatprep.subr.bf16.mxu0 0
    %442 = vmatpush1.bf16.msra.mxu0 0
    %443 = vmatprep.subr.bf16.mxu0 0
    %444 = vmatpush1.bf16.msra.mxu0 0
    %445 = vmatprep.subr.bf16.mxu0 0
    %446 = vmatpush1.bf16.msra.mxu0 0
    %447 = vmatprep.subr.bf16.mxu0 0
    %448 = vmatpush1.bf16.msra.mxu0 0
    %449 = vmatprep.subr.bf16.mxu0 0
    %450 = vmatpush1.bf16.msra.mxu0 0
    %451 = vmatprep.subr.bf16.mxu0 0
    %452 = vmatpush1.bf16.msra.mxu0 0
    %453 = vmatprep.subr.bf16.mxu0 0
    %454 = vmatpush1.bf16.msra.mxu0 0
    %455 = vmatprep.subr.bf16.mxu0 0
    %456 = vmatpush1.bf16.msra.mxu0 0
    %457 = vmatprep.mubr.bf16.mxu0 0
    %458 = vmatmul.mubr.bf16.gmra.mrb[0].mxu0 %v423
    %v459 = vpop.f32.mrb[0].mxu0
    %v460 = vadd.f32 0.0, %v459
    %v461 = vpop.f32.mrb[0].mxu0
    %v462 = vpop.f32.mrb[0].mxu0
    %v463 = vpop.f32.mrb[0].mxu0
    %464 = vdwg.mxu0
    %v465 = vadd.f32 %v203, %v460
    %v466 = vadd.f32 %v465, %v112
    %v467 = vadd.f32 %v465, %v119
    %v468 = vtanh.pop %v465
    %v469 = vpack.c.bf16 %v468, %v468
    %v471 = vsel %vm230, %v469, 0
    %473 = vmatprep.subr.bf16.mxu0 0
    %474 = vmatpush1.bf16.msra.mxu0 %v222
    %475 = vmatprep.subr.bf16.mxu0 0
    %476 = vmatpush1.bf16.msra.mxu0 %v223
    %477 = vmatprep.subr.bf16.mxu0 0
    %478 = vmatpush1.bf16.msra.mxu0 %v224
    %479 = vmatprep.subr.bf16.mxu0 0
    %480 = vmatpush1.bf16.msra.mxu0 %v225
    %481 = vmatprep.subr.bf16.mxu0 0
    %482 = vmatpush1.bf16.msra.mxu0 0
    %483 = vmatprep.subr.bf16.mxu0 0
    %484 = vmatpush1.bf16.msra.mxu0 0
    %485 = vmatprep.subr.bf16.mxu0 0
    %486 = vmatpush1.bf16.msra.mxu0 0
    %487 = vmatprep.subr.bf16.mxu0 0
    %488 = vmatpush1.bf16.msra.mxu0 0
    %489 = vmatprep.subr.bf16.mxu0 0
    %490 = vmatpush1.bf16.msra.mxu0 0
    %491 = vmatprep.subr.bf16.mxu0 0
    %492 = vmatpush1.bf16.msra.mxu0 0
    %493 = vmatprep.subr.bf16.mxu0 0
    %494 = vmatpush1.bf16.msra.mxu0 0
    %495 = vmatprep.subr.bf16.mxu0 0
    %496 = vmatpush1.bf16.msra.mxu0 0
    %497 = vmatprep.subr.bf16.mxu0 0
    %498 = vmatpush1.bf16.msra.mxu0 0
    %499 = vmatprep.subr.bf16.mxu0 0
    %500 = vmatpush1.bf16.msra.mxu0 0
    %501 = vmatprep.subr.bf16.mxu0 0
    %502 = vmatpush1.bf16.msra.mxu0 0
    %503 = vmatprep.subr.bf16.mxu0 0
    %504 = vmatpush1.bf16.msra.mxu0 0
    %505 = vmatprep.mubr.bf16.mxu0 0
    %506 = vmatmul.mubr.bf16.gmra.mrb[0].mxu0 %v471
    %v507 = vpop.f32.mrb[0].mxu0
    %v508 = vadd.f32 0.0, %v507
    %v509 = vpop.f32.mrb[0].mxu0
    %v510 = vpop.f32.mrb[0].mxu0
    %v511 = vpop.f32.mrb[0].mxu0
    %512 = vdwg.mxu0
    %v513 = vadd.f32 %v466, %v508
    %v514 = vtanh.pop %v513
    %v515 = vpack.c.bf16 %v514, %v514
    %v517 = vsel %vm230, %v515, 0
    %519 = vmatprep.subr.bf16.mxu0 0
    %520 = vmatpush1.bf16.msra.mxu0 %v222
    %521 = vmatprep.subr.bf16.mxu0 0
    %522 = vmatpush1.bf16.msra.mxu0 %v223
    %523 = vmatprep.subr.bf16.mxu0 0
    %524 = vmatpush1.bf16.msra.mxu0 %v224
    %525 = vmatprep.subr.bf16.mxu0 0
    %526 = vmatpush1.bf16.msra.mxu0 %v225
    %527 = vmatprep.subr.bf16.mxu0 0
    %528 = vmatpush1.bf16.msra.mxu0 0
    %529 = vmatprep.subr.bf16.mxu0 0
    %530 = vmatpush1.bf16.msra.mxu0 0
    %531 = vmatprep.subr.bf16.mxu0 0
    %532 = vmatpush1.bf16.msra.mxu0 0
    %533 = vmatprep.subr.bf16.mxu0 0
    %534 = vmatpush1.bf16.msra.mxu0 0
    %535 = vmatprep.subr.bf16.mxu0 0
    %536 = vmatpush1.bf16.msra.mxu0 0
    %537 = vmatprep.subr.bf16.mxu0 0
    %538 = vmatpush1.bf16.msra.mxu0 0
    %539 = vmatprep.subr.bf16.mxu0 0
    %540 = vmatpush1.bf16.msra.mxu0 0
    %541 = vmatprep.subr.bf16.mxu0 0
    %542 = vmatpush1.bf16.msra.mxu0 0
    %543 = vmatprep.subr.bf16.mxu0 0
    %544 = vmatpush1.bf16.msra.mxu0 0
    %545 = vmatprep.subr.bf16.mxu0 0
    %546 = vmatpush1.bf16.msra.mxu0 0
    %547 = vmatprep.subr.bf16.mxu0 0
    %548 = vmatpush1.bf16.msra.mxu0 0
    %549 = vmatprep.subr.bf16.mxu0 0
    %550 = vmatpush1.bf16.msra.mxu0 0
    %551 = vmatprep.mubr.bf16.mxu0 0
    %552 = vmatmul.mubr.bf16.gmra.mrb[0].mxu0 %v517
    %v553 = vpop.f32.mrb[0].mxu0
    %v554 = vadd.f32 0.0, %v553
    %v555 = vpop.f32.mrb[0].mxu0
    %v556 = vpop.f32.mrb[0].mxu0
    %v557 = vpop.f32.mrb[0].mxu0
    %558 = vdwg.mxu0
    %v559 = vadd.f32 %v466, %v554
    %v560 = vtanh.pop %v559
    %v561 = vpack.c.bf16 %v560, %v560
    %v563 = vsel %vm230, %v561, 0
    %565 = vmatprep.subr.bf16.mxu0 0
    %566 = vmatpush1.bf16.msra.mxu0 %v339
    %567 = vmatprep.subr.bf16.mxu0 0
    %568 = vmatpush1.bf16.msra.mxu0 %v340
    %569 = vmatprep.subr.bf16.mxu0 0
    %570 = vmatpush1.bf16.msra.mxu0 %v341
    %571 = vmatprep.subr.bf16.mxu0 0
    %572 = vmatpush1.bf16.msra.mxu0 %v342
    %573 = vmatprep.subr.bf16.mxu0 0
    %574 = vmatpush1.bf16.msra.mxu0 0
    %575 = vmatprep.subr.bf16.mxu0 0
    %576 = vmatpush1.bf16.msra.mxu0 0
    %577 = vmatprep.subr.bf16.mxu0 0
    %578 = vmatpush1.bf16.msra.mxu0 0
    %579 = vmatprep.subr.bf16.mxu0 0
    %580 = vmatpush1.bf16.msra.mxu0 0
    %581 = vmatprep.subr.bf16.mxu0 0
    %582 = vmatpush1.bf16.msra.mxu0 0
    %583 = vmatprep.subr.bf16.mxu0 0
    %584 = vmatpush1.bf16.msra.mxu0 0
    %585 = vmatprep.subr.bf16.mxu0 0
    %586 = vmatpush1.bf16.msra.mxu0 0
    %587 = vmatprep.subr.bf16.mxu0 0
    %588 = vmatpush1.bf16.msra.mxu0 0
    %589 = vmatprep.subr.bf16.mxu0 0
    %590 = vmatpush1.bf16.msra.mxu0 0
    %591 = vmatprep.subr.bf16.mxu0 0
    %592 = vmatpush1.bf16.msra.mxu0 0
    %593 = vmatprep.subr.bf16.mxu0 0
    %594 = vmatpush1.bf16.msra.mxu0 0
    %595 = vmatprep.subr.bf16.mxu0 0
    %596 = vmatpush1.bf16.msra.mxu0 0
    %597 = vmatprep.mubr.bf16.mxu0 0
    %598 = vmatmul.mubr.bf16.gmra.mrb[0].mxu0 %v563
    %v599 = vpop.f32.mrb[0].mxu0
    %v600 = vadd.f32 0.0, %v599
    %v601 = vpop.f32.mrb[0].mxu0
    %v602 = vpop.f32.mrb[0].mxu0
    %v603 = vpop.f32.mrb[0].mxu0
    %604 = vdwg.mxu0
    %v605 = vadd.f32 %v467, %v600
    %v606 = vtanh.pop %v605
    %v607 = vadd.f32 %v514, %v560
    %v608 = vmul.f32 %v607, 2.0
    %v609 = vadd.f32 %v468, %v608
    %v610 = vadd.f32 %v609, %v606
    %v611 = vadd.f32 %v396, %v610
    %v612 = vpack.c.bf16 %v610, %v610
    %v614 = vsel %vm230, %v612, 0
    %616 = vmatprep.subr.bf16.mxu0 0
    %617 = vmatpush1.bf16.msra.mxu0 %v414
    %618 = vmatprep.subr.bf16.mxu0 0
    %619 = vmatpush1.bf16.msra.mxu0 %v415
    %620 = vmatprep.subr.bf16.mxu0 0
    %621 = vmatpush1.bf16.msra.mxu0 %v416
    %622 = vmatprep.subr.bf16.mxu0 0
    %623 = vmatpush1.bf16.msra.mxu0 %v417
    %624 = vmatprep.subr.bf16.mxu0 0
    %625 = vmatpush1.bf16.msra.mxu0 0
    %626 = vmatprep.subr.bf16.mxu0 0
    %627 = vmatpush1.bf16.msra.mxu0 0
    %628 = vmatprep.subr.bf16.mxu0 0
    %629 = vmatpush1.bf16.msra.mxu0 0
    %630 = vmatprep.subr.bf16.mxu0 0
    %631 = vmatpush1.bf16.msra.mxu0 0
    %632 = vmatprep.subr.bf16.mxu0 0
    %633 = vmatpush1.bf16.msra.mxu0 0
    %634 = vmatprep.subr.bf16.mxu0 0
    %635 = vmatpush1.bf16.msra.mxu0 0
    %636 = vmatprep.subr.bf16.mxu0 0
    %637 = vmatpush1.bf16.msra.mxu0 0
    %638 = vmatprep.subr.bf16.mxu0 0
    %639 = vmatpush1.bf16.msra.mxu0 0
    %640 = vmatprep.subr.bf16.mxu0 0
    %641 = vmatpush1.bf16.msra.mxu0 0
    %642 = vmatprep.subr.bf16.mxu0 0
    %643 = vmatpush1.bf16.msra.mxu0 0
    %644 = vmatprep.subr.bf16.mxu0 0
    %645 = vmatpush1.bf16.msra.mxu0 0
    %646 = vmatprep.subr.bf16.mxu0 0
    %647 = vmatpush1.bf16.msra.mxu0 0
    %648 = vmatprep.mubr.bf16.mxu0 0
    %649 = vmatmul.mubr.bf16.gmra.mrb[0].mxu0 %v614
    %v650 = vpop.f32.mrb[0].mxu0
    %v651 = vadd.f32 0.0, %v650
    %v652 = vpop.f32.mrb[0].mxu0
    %v653 = vpop.f32.mrb[0].mxu0
    %v654 = vpop.f32.mrb[0].mxu0
    %655 = vdwg.mxu0
    %v656 = vadd.f32 %v467, %v651
    %v657 = vadd.f32 %v656, %v112
    %v658 = vadd.f32 %v656, %v119
    %v659 = vtanh.pop %v656
    %v660 = vpack.c.bf16 %v659, %v659
    %v662 = vsel %vm230, %v660, 0
    %664 = vmatprep.subr.bf16.mxu0 0
    %665 = vmatpush1.bf16.msra.mxu0 %v222
    %666 = vmatprep.subr.bf16.mxu0 0
    %667 = vmatpush1.bf16.msra.mxu0 %v223
    %668 = vmatprep.subr.bf16.mxu0 0
    %669 = vmatpush1.bf16.msra.mxu0 %v224
    %670 = vmatprep.subr.bf16.mxu0 0
    %671 = vmatpush1.bf16.msra.mxu0 %v225
    %672 = vmatprep.subr.bf16.mxu0 0
    %673 = vmatpush1.bf16.msra.mxu0 0
    %674 = vmatprep.subr.bf16.mxu0 0
    %675 = vmatpush1.bf16.msra.mxu0 0
    %676 = vmatprep.subr.bf16.mxu0 0
    %677 = vmatpush1.bf16.msra.mxu0 0
    %678 = vmatprep.subr.bf16.mxu0 0
    %679 = vmatpush1.bf16.msra.mxu0 0
    %680 = vmatprep.subr.bf16.mxu0 0
    %681 = vmatpush1.bf16.msra.mxu0 0
    %682 = vmatprep.subr.bf16.mxu0 0
    %683 = vmatpush1.bf16.msra.mxu0 0
    %684 = vmatprep.subr.bf16.mxu0 0
    %685 = vmatpush1.bf16.msra.mxu0 0
    %686 = vmatprep.subr.bf16.mxu0 0
    %687 = vmatpush1.bf16.msra.mxu0 0
    %688 = vmatprep.subr.bf16.mxu0 0
    %689 = vmatpush1.bf16.msra.mxu0 0
    %690 = vmatprep.subr.bf16.mxu0 0
    %691 = vmatpush1.bf16.msra.mxu0 0
    %692 = vmatprep.subr.bf16.mxu0 0
    %693 = vmatpush1.bf16.msra.mxu0 0
    %694 = vmatprep.subr.bf16.mxu0 0
    %695 = vmatpush1.bf16.msra.mxu0 0
    %696 = vmatprep.mubr.bf16.mxu0 0
    %697 = vmatmul.mubr.bf16.gmra.mrb[0].mxu0 %v662
    %v698 = vpop.f32.mrb[0].mxu0
    %v699 = vadd.f32 0.0, %v698
    %v700 = vpop.f32.mrb[0].mxu0
    %v701 = vpop.f32.mrb[0].mxu0
    %v702 = vpop.f32.mrb[0].mxu0
    %703 = vdwg.mxu0
    %v704 = vadd.f32 %v657, %v699
    %v705 = vtanh.pop %v704
    %v706 = vpack.c.bf16 %v705, %v705
    %v708 = vsel %vm230, %v706, 0
    %710 = vmatprep.subr.bf16.mxu0 0
    %711 = vmatpush1.bf16.msra.mxu0 %v222
    %712 = vmatprep.subr.bf16.mxu0 0
    %713 = vmatpush1.bf16.msra.mxu0 %v223
    %714 = vmatprep.subr.bf16.mxu0 0
    %715 = vmatpush1.bf16.msra.mxu0 %v224
    %716 = vmatprep.subr.bf16.mxu0 0
    %717 = vmatpush1.bf16.msra.mxu0 %v225
    %718 = vmatprep.subr.bf16.mxu0 0
    %719 = vmatpush1.bf16.msra.mxu0 0
    %720 = vmatprep.subr.bf16.mxu0 0
    %721 = vmatpush1.bf16.msra.mxu0 0
    %722 = vmatprep.subr.bf16.mxu0 0
    %723 = vmatpush1.bf16.msra.mxu0 0
    %724 = vmatprep.subr.bf16.mxu0 0
    %725 = vmatpush1.bf16.msra.mxu0 0
    %726 = vmatprep.subr.bf16.mxu0 0
    %727 = vmatpush1.bf16.msra.mxu0 0
    %728 = vmatprep.subr.bf16.mxu0 0
    %729 = vmatpush1.bf16.msra.mxu0 0
    %730 = vmatprep.subr.bf16.mxu0 0
    %731 = vmatpush1.bf16.msra.mxu0 0
    %732 = vmatprep.subr.bf16.mxu0 0
    %733 = vmatpush1.bf16.msra.mxu0 0
    %734 = vmatprep.subr.bf16.mxu0 0
    %735 = vmatpush1.bf16.msra.mxu0 0
    %736 = vmatprep.subr.bf16.mxu0 0
    %737 = vmatpush1.bf16.msra.mxu0 0
    %738 = vmatprep.subr.bf16.mxu0 0
    %739 = vmatpush1.bf16.msra.mxu0 0
    %740 = vmatprep.subr.bf16.mxu0 0
    %741 = vmatpush1.bf16.msra.mxu0 0
    %742 = vmatprep.mubr.bf16.mxu0 0
    %743 = vmatmul.mubr.bf16.gmra.mrb[0].mxu0 %v708
    %v744 = vpop.f32.mrb[0].mxu0
    %v745 = vadd.f32 0.0, %v744
    %v746 = vpop.f32.mrb[0].mxu0
    %v747 = vpop.f32.mrb[0].mxu0
    %v748 = vpop.f32.mrb[0].mxu0
    %749 = vdwg.mxu0
    %v750 = vadd.f32 %v657, %v745
    %v751 = vtanh.pop %v750
    %v752 = vpack.c.bf16 %v751, %v751
    %v754 = vsel %vm230, %v752, 0
    %756 = vmatprep.subr.bf16.mxu0 0
    %757 = vmatpush1.bf16.msra.mxu0 %v339
    %758 = vmatprep.subr.bf16.mxu0 0
    %759 = vmatpush1.bf16.msra.mxu0 %v340
    %760 = vmatprep.subr.bf16.mxu0 0
    %761 = vmatpush1.bf16.msra.mxu0 %v341
    %762 = vmatprep.subr.bf16.mxu0 0
    %763 = vmatpush1.bf16.msra.mxu0 %v342
    %764 = vmatprep.subr.bf16.mxu0 0
    %765 = vmatpush1.bf16.msra.mxu0 0
    %766 = vmatprep.subr.bf16.mxu0 0
    %767 = vmatpush1.bf16.msra.mxu0 0
    %768 = vmatprep.subr.bf16.mxu0 0
    %769 = vmatpush1.bf16.msra.mxu0 0
    %770 = vmatprep.subr.bf16.mxu0 0
    %771 = vmatpush1.bf16.msra.mxu0 0
    %772 = vmatprep.subr.bf16.mxu0 0
    %773 = vmatpush1.bf16.msra.mxu0 0
    %774 = vmatprep.subr.bf16.mxu0 0
    %775 = vmatpush1.bf16.msra.mxu0 0
    %776 = vmatprep.subr.bf16.mxu0 0
    %777 = vmatpush1.bf16.msra.mxu0 0
    %778 = vmatprep.subr.bf16.mxu0 0
    %779 = vmatpush1.bf16.msra.mxu0 0
    %780 = vmatprep.subr.bf16.mxu0 0
    %781 = vmatpush1.bf16.msra.mxu0 0
    %782 = vmatprep.subr.bf16.mxu0 0
    %783 = vmatpush1.bf16.msra.mxu0 0
    %784 = vmatprep.subr.bf16.mxu0 0
    %785 = vmatpush1.bf16.msra.mxu0 0
    %786 = vmatprep.subr.bf16.mxu0 0
    %787 = vmatpush1.bf16.msra.mxu0 0
    %788 = vmatprep.mubr.bf16.mxu0 0
    %789 = vmatmul.mubr.bf16.gmra.mrb[0].mxu0 %v754
    %v790 = vpop.f32.mrb[0].mxu0
    %v791 = vadd.f32 0.0, %v790
    %v792 = vpop.f32.mrb[0].mxu0
    %v793 = vpop.f32.mrb[0].mxu0
    %v794 = vpop.f32.mrb[0].mxu0
    %795 = vdwg.mxu0
    %v796 = vadd.f32 %v658, %v791
    %v797 = vtanh.pop %v796
    %v798 = vadd.f32 %v705, %v751
    %v799 = vmul.f32 %v798, 2.0
    %v800 = vadd.f32 %v659, %v799
    %v801 = vadd.f32 %v800, %v797
    %v802 = vadd.f32 %v611, %v801
    %v803 = vpack.c.bf16 %v801, %v801
    %v805 = vsel %vm230, %v803, 0
    %807 = vmatprep.subr.bf16.mxu0 0
    %808 = vmatpush1.bf16.msra.mxu0 %v414
    %809 = vmatprep.subr.bf16.mxu0 0
    %810 = vmatpush1.bf16.msra.mxu0 %v415
    %811 = vmatprep.subr.bf16.mxu0 0
    %812 = vmatpush1.bf16.msra.mxu0 %v416
    %813 = vmatprep.subr.bf16.mxu0 0
    %814 = vmatpush1.bf16.msra.mxu0 %v417
    %815 = vmatprep.subr.bf16.mxu0 0
    %816 = vmatpush1.bf16.msra.mxu0 0
    %817 = vmatprep.subr.bf16.mxu0 0
    %818 = vmatpush1.bf16.msra.mxu0 0
    %819 = vmatprep.subr.bf16.mxu0 0
    %820 = vmatpush1.bf16.msra.mxu0 0
    %821 = vmatprep.subr.bf16.mxu0 0
    %822 = vmatpush1.bf16.msra.mxu0 0
    %823 = vmatprep.subr.bf16.mxu0 0
    %824 = vmatpush1.bf16.msra.mxu0 0
    %825 = vmatprep.subr.bf16.mxu0 0
    %826 = vmatpush1.bf16.msra.mxu0 0
    %827 = vmatprep.subr.bf16.mxu0 0
    %828 = vmatpush1.bf16.msra.mxu0 0
    %829 = vmatprep.subr.bf16.mxu0 0
    %830 = vmatpush1.bf16.msra.mxu0 0
    %831 = vmatprep.subr.bf16.mxu0 0
    %832 = vmatpush1.bf16.msra.mxu0 0
    %833 = vmatprep.subr.bf16.mxu0 0
    %834 = vmatpush1.bf16.msra.mxu0 0
    %835 = vmatprep.subr.bf16.mxu0 0
    %836 = vmatpush1.bf16.msra.mxu0 0
    %837 = vmatprep.subr.bf16.mxu0 0
    %838 = vmatpush1.bf16.msra.mxu0 0
    %839 = vmatprep.mubr.bf16.mxu0 0
    %840 = vmatmul.mubr.bf16.gmra.mrb[0].mxu0 %v805
    %v841 = vpop.f32.mrb[0].mxu0
    %v842 = vadd.f32 0.0, %v841
    %v843 = vpop.f32.mrb[0].mxu0
    %v844 = vpop.f32.mrb[0].mxu0
    %v845 = vpop.f32.mrb[0].mxu0
    %846 = vdwg.mxu0
    %v847 = vadd.f32 %v658, %v842
    %v848 = vadd.f32 %v847, %v112
    %v849 = vadd.f32 %v847, %v119
    %v850 = vtanh.pop %v847
    %v851 = vpack.c.bf16 %v850, %v850
    %v853 = vsel %vm230, %v851, 0
    %855 = vmatprep.subr.bf16.mxu0 0
    %856 = vmatpush1.bf16.msra.mxu0 %v222
    %857 = vmatprep.subr.bf16.mxu0 0
    %858 = vmatpush1.bf16.msra.mxu0 %v223
    %859 = vmatprep.subr.bf16.mxu0 0
    %860 = vmatpush1.bf16.msra.mxu0 %v224
    %861 = vmatprep.subr.bf16.mxu0 0
    %862 = vmatpush1.bf16.msra.mxu0 %v225
    %863 = vmatprep.subr.bf16.mxu0 0
    %864 = vmatpush1.bf16.msra.mxu0 0
    %865 = vmatprep.subr.bf16.mxu0 0
    %866 = vmatpush1.bf16.msra.mxu0 0
    %867 = vmatprep.subr.bf16.mxu0 0
    %868 = vmatpush1.bf16.msra.mxu0 0
    %869 = vmatprep.subr.bf16.mxu0 0
    %870 = vmatpush1.bf16.msra.mxu0 0
    %871 = vmatprep.subr.bf16.mxu0 0
    %872 = vmatpush1.bf16.msra.mxu0 0
    %873 = vmatprep.subr.bf16.mxu0 0
    %874 = vmatpush1.bf16.msra.mxu0 0
    %875 = vmatprep.subr.bf16.mxu0 0
    %876 = vmatpush1.bf16.msra.mxu0 0
    %877 = vmatprep.subr.bf16.mxu0 0
    %878 = vmatpush1.bf16.msra.mxu0 0
    %879 = vmatprep.subr.bf16.mxu0 0
    %880 = vmatpush1.bf16.msra.mxu0 0
    %881 = vmatprep.subr.bf16.mxu0 0
    %882 = vmatpush1.bf16.msra.mxu0 0
    %883 = vmatprep.subr.bf16.mxu0 0
    %884 = vmatpush1.bf16.msra.mxu0 0
    %885 = vmatprep.subr.bf16.mxu0 0
    %886 = vmatpush1.bf16.msra.mxu0 0
    %887 = vmatprep.mubr.bf16.mxu0 0
    %888 = vmatmul.mubr.bf16.gmra.mrb[0].mxu0 %v853
    %v889 = vpop.f32.mrb[0].mxu0
    %v890 = vadd.f32 0.0, %v889
    %v891 = vpop.f32.mrb[0].mxu0
    %v892 = vpop.f32.mrb[0].mxu0
    %v893 = vpop.f32.mrb[0].mxu0
    %894 = vdwg.mxu0
    %v895 = vadd.f32 %v848, %v890
    %v896 = vtanh.pop %v895
    %v897 = vpack.c.bf16 %v896, %v896
    %v899 = vsel %vm230, %v897, 0
    %901 = vmatprep.subr.bf16.mxu0 0
    %902 = vmatpush1.bf16.msra.mxu0 %v222
    %903 = vmatprep.subr.bf16.mxu0 0
    %904 = vmatpush1.bf16.msra.mxu0 %v223
    %905 = vmatprep.subr.bf16.mxu0 0
    %906 = vmatpush1.bf16.msra.mxu0 %v224
    %907 = vmatprep.subr.bf16.mxu0 0
    %908 = vmatpush1.bf16.msra.mxu0 %v225
    %909 = vmatprep.subr.bf16.mxu0 0
    %910 = vmatpush1.bf16.msra.mxu0 0
    %911 = vmatprep.subr.bf16.mxu0 0
    %912 = vmatpush1.bf16.msra.mxu0 0
    %913 = vmatprep.subr.bf16.mxu0 0
    %914 = vmatpush1.bf16.msra.mxu0 0
    %915 = vmatprep.subr.bf16.mxu0 0
    %916 = vmatpush1.bf16.msra.mxu0 0
    %917 = vmatprep.subr.bf16.mxu0 0
    %918 = vmatpush1.bf16.msra.mxu0 0
    %919 = vmatprep.subr.bf16.mxu0 0
    %920 = vmatpush1.bf16.msra.mxu0 0
    %921 = vmatprep.subr.bf16.mxu0 0
    %922 = vmatpush1.bf16.msra.mxu0 0
    %923 = vmatprep.subr.bf16.mxu0 0
    %924 = vmatpush1.bf16.msra.mxu0 0
    %925 = vmatprep.subr.bf16.mxu0 0
    %926 = vmatpush1.bf16.msra.mxu0 0
    %927 = vmatprep.subr.bf16.mxu0 0
    %928 = vmatpush1.bf16.msra.mxu0 0
    %929 = vmatprep.subr.bf16.mxu0 0
    %930 = vmatpush1.bf16.msra.mxu0 0
    %931 = vmatprep.subr.bf16.mxu0 0
    %932 = vmatpush1.bf16.msra.mxu0 0
    %933 = vmatprep.mubr.bf16.mxu0 0
    %934 = vmatmul.mubr.bf16.gmra.mrb[0].mxu0 %v899
    %v935 = vpop.f32.mrb[0].mxu0
    %v936 = vadd.f32 0.0, %v935
    %v937 = vpop.f32.mrb[0].mxu0
    %v938 = vpop.f32.mrb[0].mxu0
    %v939 = vpop.f32.mrb[0].mxu0
    %940 = vdwg.mxu0
    %v941 = vadd.f32 %v848, %v936
    %v942 = vtanh.pop %v941
    %v943 = vpack.c.bf16 %v942, %v942
    %v945 = vsel %vm230, %v943, 0
    %947 = vmatprep.subr.bf16.mxu0 0
    %948 = vmatpush1.bf16.msra.mxu0 %v339
    %949 = vmatprep.subr.bf16.mxu0 0
    %950 = vmatpush1.bf16.msra.mxu0 %v340
    %951 = vmatprep.subr.bf16.mxu0 0
    %952 = vmatpush1.bf16.msra.mxu0 %v341
    %953 = vmatprep.subr.bf16.mxu0 0
    %954 = vmatpush1.bf16.msra.mxu0 %v342
    %955 = vmatprep.subr.bf16.mxu0 0
    %956 = vmatpush1.bf16.msra.mxu0 0
    %957 = vmatprep.subr.bf16.mxu0 0
    %958 = vmatpush1.bf16.msra.mxu0 0
    %959 = vmatprep.subr.bf16.mxu0 0
    %960 = vmatpush1.bf16.msra.mxu0 0
    %961 = vmatprep.subr.bf16.mxu0 0
    %962 = vmatpush1.bf16.msra.mxu0 0
    %963 = vmatprep.subr.bf16.mxu0 0
    %964 = vmatpush1.bf16.msra.mxu0 0
    %965 = vmatprep.subr.bf16.mxu0 0
    %966 = vmatpush1.bf16.msra.mxu0 0
    %967 = vmatprep.subr.bf16.mxu0 0
    %968 = vmatpush1.bf16.msra.mxu0 0
    %969 = vmatprep.subr.bf16.mxu0 0
    %970 = vmatpush1.bf16.msra.mxu0 0
    %971 = vmatprep.subr.bf16.mxu0 0
    %972 = vmatpush1.bf16.msra.mxu0 0
    %973 = vmatprep.subr.bf16.mxu0 0
    %974 = vmatpush1.bf16.msra.mxu0 0
    %975 = vmatprep.subr.bf16.mxu0 0
    %976 = vmatpush1.bf16.msra.mxu0 0
    %977 = vmatprep.subr.bf16.mxu0 0
    %978 = vmatpush1.bf16.msra.mxu0 0
    %979 = vmatprep.mubr.bf16.mxu0 0
    %980 = vmatmul.mubr.bf16.gmra.mrb[0].mxu0 %v945
    %v981 = vpop.f32.mrb[0].mxu0
    %v982 = vadd.f32 0.0, %v981
    %v983 = vpop.f32.mrb[0].mxu0
    %v984 = vpop.f32.mrb[0].mxu0
    %v985 = vpop.f32.mrb[0].mxu0
    %986 = vdwg.mxu0
    %v987 = vadd.f32 %v849, %v982
    %v988 = vtanh.pop %v987
    %v989 = vadd.f32 %v896, %v942
    %v990 = vmul.f32 %v989, 2.0
    %v991 = vadd.f32 %v850, %v990
    %v992 = vadd.f32 %v991, %v988
    %v993 = vadd.f32 %v802, %v992
    %v994 = vpack.c.bf16 %v992, %v992
    %v996 = vsel %vm230, %v994, 0
    %998 = vmatprep.subr.bf16.mxu0 0
    %999 = vmatpush1.bf16.msra.mxu0 %v414
    %1000 = vmatprep.subr.bf16.mxu0 0
    %1001 = vmatpush1.bf16.msra.mxu0 %v415
    %1002 = vmatprep.subr.bf16.mxu0 0
    %1003 = vmatpush1.bf16.msra.mxu0 %v416
    %1004 = vmatprep.subr.bf16.mxu0 0
    %1005 = vmatpush1.bf16.msra.mxu0 %v417
    %1006 = vmatprep.subr.bf16.mxu0 0
    %1007 = vmatpush1.bf16.msra.mxu0 0
    %1008 = vmatprep.subr.bf16.mxu0 0
    %1009 = vmatpush1.bf16.msra.mxu0 0
    %1010 = vmatprep.subr.bf16.mxu0 0
    %1011 = vmatpush1.bf16.msra.mxu0 0
    %1012 = vmatprep.subr.bf16.mxu0 0
    %1013 = vmatpush1.bf16.msra.mxu0 0
    %1014 = vmatprep.subr.bf16.mxu0 0
    %1015 = vmatpush1.bf16.msra.mxu0 0
    %1016 = vmatprep.subr.bf16.mxu0 0
    %1017 = vmatpush1.bf16.msra.mxu0 0
    %1018 = vmatprep.subr.bf16.mxu0 0
    %1019 = vmatpush1.bf16.msra.mxu0 0
    %1020 = vmatprep.subr.bf16.mxu0 0
    %1021 = vmatpush1.bf16.msra.mxu0 0
    %1022 = vmatprep.subr.bf16.mxu0 0
    %1023 = vmatpush1.bf16.msra.mxu0 0
    %1024 = vmatprep.subr.bf16.mxu0 0
    %1025 = vmatpush1.bf16.msra.mxu0 0
    %1026 = vmatprep.subr.bf16.mxu0 0
    %1027 = vmatpush1.bf16.msra.mxu0 0
    %1028 = vmatprep.subr.bf16.mxu0 0
    %1029 = vmatpush1.bf16.msra.mxu0 0
    %1030 = vmatprep.mubr.bf16.mxu0 0
    %1031 = vmatmul.mubr.bf16.gmra.mrb[0].mxu0 %v996
    %v1032 = vpop.f32.mrb[0].mxu0
    %v1033 = vadd.f32 0.0, %v1032
    %v1034 = vpop.f32.mrb[0].mxu0
    %v1035 = vpop.f32.mrb[0].mxu0
    %v1036 = vpop.f32.mrb[0].mxu0
    %1037 = vdwg.mxu0
    %v1038 = vadd.f32 %v849, %v1033
    %v1039 = vadd.f32 %v1038, %v112
    %v1040 = vadd.f32 %v1038, %v119
    %v1041 = vtanh.pop %v1038
    %v1042 = vpack.c.bf16 %v1041, %v1041
    %v1044 = vsel %vm230, %v1042, 0
    %1046 = vmatprep.subr.bf16.mxu0 0
    %1047 = vmatpush1.bf16.msra.mxu0 %v222
    %1048 = vmatprep.subr.bf16.mxu0 0
    %1049 = vmatpush1.bf16.msra.mxu0 %v223
    %1050 = vmatprep.subr.bf16.mxu0 0
    %1051 = vmatpush1.bf16.msra.mxu0 %v224
    %1052 = vmatprep.subr.bf16.mxu0 0
    %1053 = vmatpush1.bf16.msra.mxu0 %v225
    %1054 = vmatprep.subr.bf16.mxu0 0
    %1055 = vmatpush1.bf16.msra.mxu0 0
    %1056 = vmatprep.subr.bf16.mxu0 0
    %1057 = vmatpush1.bf16.msra.mxu0 0
    %1058 = vmatprep.subr.bf16.mxu0 0
    %1059 = vmatpush1.bf16.msra.mxu0 0
    %1060 = vmatprep.subr.bf16.mxu0 0
    %1061 = vmatpush1.bf16.msra.mxu0 0
    %1062 = vmatprep.subr.bf16.mxu0 0
    %1063 = vmatpush1.bf16.msra.mxu0 0
    %1064 = vmatprep.subr.bf16.mxu0 0
    %1065 = vmatpush1.bf16.msra.mxu0 0
    %1066 = vmatprep.subr.bf16.mxu0 0
    %1067 = vmatpush1.bf16.msra.mxu0 0
    %1068 = vmatprep.subr.bf16.mxu0 0
    %1069 = vmatpush1.bf16.msra.mxu0 0
    %1070 = vmatprep.subr.bf16.mxu0 0
    %1071 = vmatpush1.bf16.msra.mxu0 0
    %1072 = vmatprep.subr.bf16.mxu0 0
    %1073 = vmatpush1.bf16.msra.mxu0 0
    %1074 = vmatprep.subr.bf16.mxu0 0
    %1075 = vmatpush1.bf16.msra.mxu0 0
    %1076 = vmatprep.subr.bf16.mxu0 0
    %1077 = vmatpush1.bf16.msra.mxu0 0
    %1078 = vmatprep.mubr.bf16.mxu0 0
    %1079 = vmatmul.mubr.bf16.gmra.mrb[0].mxu0 %v1044
    %v1080 = vpop.f32.mrb[0].mxu0
    %v1081 = vadd.f32 0.0, %v1080
    %v1082 = vpop.f32.mrb[0].mxu0
    %v1083 = vpop.f32.mrb[0].mxu0
    %v1084 = vpop.f32.mrb[0].mxu0
    %1085 = vdwg.mxu0
    %v1086 = vadd.f32 %v1039, %v1081
    %v1087 = vtanh.pop %v1086
    %v1088 = vpack.c.bf16 %v1087, %v1087
    %v1090 = vsel %vm230, %v1088, 0
    %1092 = vmatprep.subr.bf16.mxu0 0
    %1093 = vmatpush1.bf16.msra.mxu0 %v222
    %1094 = vmatprep.subr.bf16.mxu0 0
    %1095 = vmatpush1.bf16.msra.mxu0 %v223
    %1096 = vmatprep.subr.bf16.mxu0 0
    %1097 = vmatpush1.bf16.msra.mxu0 %v224
    %1098 = vmatprep.subr.bf16.mxu0 0
    %1099 = vmatpush1.bf16.msra.mxu0 %v225
    %1100 = vmatprep.subr.bf16.mxu0 0
    %1101 = vmatpush1.bf16.msra.mxu0 0
    %1102 = vmatprep.subr.bf16.mxu0 0
    %1103 = vmatpush1.bf16.msra.mxu0 0
    %1104 = vmatprep.subr.bf16.mxu0 0
    %1105 = vmatpush1.bf16.msra.mxu0 0
    %1106 = vmatprep.subr.bf16.mxu0 0
    %1107 = vmatpush1.bf16.msra.mxu0 0
    %1108 = vmatprep.subr.bf16.mxu0 0
    %1109 = vmatpush1.bf16.msra.mxu0 0
    %1110 = vmatprep.subr.bf16.mxu0 0
    %1111 = vmatpush1.bf16.msra.mxu0 0
    %1112 = vmatprep.subr.bf16.mxu0 0
    %1113 = vmatpush1.bf16.msra.mxu0 0
    %1114 = vmatprep.subr.bf16.mxu0 0
    %1115 = vmatpush1.bf16.msra.mxu0 0
    %1116 = vmatprep.subr.bf16.mxu0 0
    %1117 = vmatpush1.bf16.msra.mxu0 0
    %1118 = vmatprep.subr.bf16.mxu0 0
    %1119 = vmatpush1.bf16.msra.mxu0 0
    %1120 = vmatprep.subr.bf16.mxu0 0
    %1121 = vmatpush1.bf16.msra.mxu0 0
    %1122 = vmatprep.subr.bf16.mxu0 0
    %1123 = vmatpush1.bf16.msra.mxu0 0
    %1124 = vmatprep.mubr.bf16.mxu0 0
    %1125 = vmatmul.mubr.bf16.gmra.mrb[0].mxu0 %v1090
    %v1126 = vpop.f32.mrb[0].mxu0
    %v1127 = vadd.f32 0.0, %v1126
    %v1128 = vpop.f32.mrb[0].mxu0
    %v1129 = vpop.f32.mrb[0].mxu0
    %v1130 = vpop.f32.mrb[0].mxu0
    %1131 = vdwg.mxu0
    %v1132 = vadd.f32 %v1039, %v1127
    %v1133 = vtanh.pop %v1132
    %v1134 = vpack.c.bf16 %v1133, %v1133
    %v1136 = vsel %vm230, %v1134, 0
    %1138 = vmatprep.subr.bf16.mxu0 0
    %1139 = vmatpush1.bf16.msra.mxu0 %v339
    %1140 = vmatprep.subr.bf16.mxu0 0
    %1141 = vmatpush1.bf16.msra.mxu0 %v340
    %1142 = vmatprep.subr.bf16.mxu0 0
    %1143 = vmatpush1.bf16.msra.mxu0 %v341
    %1144 = vmatprep.subr.bf16.mxu0 0
    %1145 = vmatpush1.bf16.msra.mxu0 %v342
    %1146 = vmatprep.subr.bf16.mxu0 0
    %1147 = vmatpush1.bf16.msra.mxu0 0
    %1148 = vmatprep.subr.bf16.mxu0 0
    %1149 = vmatpush1.bf16.msra.mxu0 0
    %1150 = vmatprep.subr.bf16.mxu0 0
    %1151 = vmatpush1.bf16.msra.mxu0 0
    %1152 = vmatprep.subr.bf16.mxu0 0
    %1153 = vmatpush1.bf16.msra.mxu0 0
    %1154 = vmatprep.subr.bf16.mxu0 0
    %1155 = vmatpush1.bf16.msra.mxu0 0
    %1156 = vmatprep.subr.bf16.mxu0 0
    %1157 = vmatpush1.bf16.msra.mxu0 0
    %1158 = vmatprep.subr.bf16.mxu0 0
    %1159 = vmatpush1.bf16.msra.mxu0 0
    %1160 = vmatprep.subr.bf16.mxu0 0
    %1161 = vmatpush1.bf16.msra.mxu0 0
    %1162 = vmatprep.subr.bf16.mxu0 0
    %1163 = vmatpush1.bf16.msra.mxu0 0
    %1164 = vmatprep.subr.bf16.mxu0 0
    %1165 = vmatpush1.bf16.msra.mxu0 0
    %1166 = vmatprep.subr.bf16.mxu0 0
    %1167 = vmatpush1.bf16.msra.mxu0 0
    %1168 = vmatprep.subr.bf16.mxu0 0
    %1169 = vmatpush1.bf16.msra.mxu0 0
    %1170 = vmatprep.mubr.bf16.mxu0 0
    %1171 = vmatmul.mubr.bf16.gmra.mrb[0].mxu0 %v1136
    %v1172 = vpop.f32.mrb[0].mxu0
    %v1173 = vadd.f32 0.0, %v1172
    %v1174 = vpop.f32.mrb[0].mxu0
    %v1175 = vpop.f32.mrb[0].mxu0
    %v1176 = vpop.f32.mrb[0].mxu0
    %1177 = vdwg.mxu0
    %v1178 = vadd.f32 %v1040, %v1173
    %v1179 = vtanh.pop %v1178
    %v1180 = vadd.f32 %v1087, %v1133
    %v1181 = vmul.f32 %v1180, 2.0
    %v1182 = vadd.f32 %v1041, %v1181
    %v1183 = vadd.f32 %v1182, %v1179
    %v1184 = vadd.f32 %v993, %v1183
    %v1185 = vpack.c.bf16 %v1183, %v1183
    %v1187 = vsel %vm230, %v1185, 0
    %1189 = vmatprep.subr.bf16.mxu0 0
    %1190 = vmatpush1.bf16.msra.mxu0 %v414
    %1191 = vmatprep.subr.bf16.mxu0 0
    %1192 = vmatpush1.bf16.msra.mxu0 %v415
    %1193 = vmatprep.subr.bf16.mxu0 0
    %1194 = vmatpush1.bf16.msra.mxu0 %v416
    %1195 = vmatprep.subr.bf16.mxu0 0
    %1196 = vmatpush1.bf16.msra.mxu0 %v417
    %1197 = vmatprep.subr.bf16.mxu0 0
    %1198 = vmatpush1.bf16.msra.mxu0 0
    %1199 = vmatprep.subr.bf16.mxu0 0
    %1200 = vmatpush1.bf16.msra.mxu0 0
    %1201 = vmatprep.subr.bf16.mxu0 0
    %1202 = vmatpush1.bf16.msra.mxu0 0
    %1203 = vmatprep.subr.bf16.mxu0 0
    %1204 = vmatpush1.bf16.msra.mxu0 0
    %1205 = vmatprep.subr.bf16.mxu0 0
    %1206 = vmatpush1.bf16.msra.mxu0 0
    %1207 = vmatprep.subr.bf16.mxu0 0
    %1208 = vmatpush1.bf16.msra.mxu0 0
    %1209 = vmatprep.subr.bf16.mxu0 0
    %1210 = vmatpush1.bf16.msra.mxu0 0
    %1211 = vmatprep.subr.bf16.mxu0 0
    %1212 = vmatpush1.bf16.msra.mxu0 0
    %1213 = vmatprep.subr.bf16.mxu0 0
    %1214 = vmatpush1.bf16.msra.mxu0 0
    %1215 = vmatprep.subr.bf16.mxu0 0
    %1216 = vmatpush1.bf16.msra.mxu0 0
    %1217 = vmatprep.subr.bf16.mxu0 0
    %1218 = vmatpush1.bf16.msra.mxu0 0
    %1219 = vmatprep.subr.bf16.mxu0 0
    %1220 = vmatpush1.bf16.msra.mxu0 0
    %1221 = vmatprep.mubr.bf16.mxu0 0
    %1222 = vmatmul.mubr.bf16.gmra.mrb[0].mxu0 %v1187
    %v1223 = vpop.f32.mrb[0].mxu0
    %v1224 = vadd.f32 0.0, %v1223
    %v1225 = vpop.f32.mrb[0].mxu0
    %v1226 = vpop.f32.mrb[0].mxu0
    %v1227 = vpop.f32.mrb[0].mxu0
    %1228 = vdwg.mxu0
    %v1229 = vadd.f32 %v1040, %v1224
    %v1230 = vadd.f32 %v1229, %v112
    %v1231 = vadd.f32 %v1229, %v119
    %v1232 = vtanh.pop %v1229
    %v1233 = vpack.c.bf16 %v1232, %v1232
    %v1235 = vsel %vm230, %v1233, 0
    %1237 = vmatprep.subr.bf16.mxu0 0
    %1238 = vmatpush1.bf16.msra.mxu0 %v222
    %1239 = vmatprep.subr.bf16.mxu0 0
    %1240 = vmatpush1.bf16.msra.mxu0 %v223
    %1241 = vmatprep.subr.bf16.mxu0 0
    %1242 = vmatpush1.bf16.msra.mxu0 %v224
    %1243 = vmatprep.subr.bf16.mxu0 0
    %1244 = vmatpush1.bf16.msra.mxu0 %v225
    %1245 = vmatprep.subr.bf16.mxu0 0
    %1246 = vmatpush1.bf16.msra.mxu0 0
    %1247 = vmatprep.subr.bf16.mxu0 0
    %1248 = vmatpush1.bf16.msra.mxu0 0
    %1249 = vmatprep.subr.bf16.mxu0 0
    %1250 = vmatpush1.bf16.msra.mxu0 0
    %1251 = vmatprep.subr.bf16.mxu0 0
    %1252 = vmatpush1.bf16.msra.mxu0 0
    %1253 = vmatprep.subr.bf16.mxu0 0
    %1254 = vmatpush1.bf16.msra.mxu0 0
    %1255 = vmatprep.subr.bf16.mxu0 0
    %1256 = vmatpush1.bf16.msra.mxu0 0
    %1257 = vmatprep.subr.bf16.mxu0 0
    %1258 = vmatpush1.bf16.msra.mxu0 0
    %1259 = vmatprep.subr.bf16.mxu0 0
    %1260 = vmatpush1.bf16.msra.mxu0 0
    %1261 = vmatprep.subr.bf16.mxu0 0
    %1262 = vmatpush1.bf16.msra.mxu0 0
    %1263 = vmatprep.subr.bf16.mxu0 0
    %1264 = vmatpush1.bf16.msra.mxu0 0
    %1265 = vmatprep.subr.bf16.mxu0 0
    %1266 = vmatpush1.bf16.msra.mxu0 0
    %1267 = vmatprep.subr.bf16.mxu0 0
    %1268 = vmatpush1.bf16.msra.mxu0 0
    %1269 = vmatprep.mubr.bf16.mxu0 0
    %1270 = vmatmul.mubr.bf16.gmra.mrb[0].mxu0 %v1235
    %v1271 = vpop.f32.mrb[0].mxu0
    %v1272 = vadd.f32 0.0, %v1271
    %v1273 = vpop.f32.mrb[0].mxu0
    %v1274 = vpop.f32.mrb[0].mxu0
    %v1275 = vpop.f32.mrb[0].mxu0
    %1276 = vdwg.mxu0
    %v1277 = vadd.f32 %v1230, %v1272
    %v1278 = vtanh.pop %v1277
    %v1279 = vpack.c.bf16 %v1278, %v1278
    %v1281 = vsel %vm230, %v1279, 0
    %1283 = vmatprep.subr.bf16.mxu0 0
    %1284 = vmatpush1.bf16.msra.mxu0 %v222
    %1285 = vmatprep.subr.bf16.mxu0 0
    %1286 = vmatpush1.bf16.msra.mxu0 %v223
    %1287 = vmatprep.subr.bf16.mxu0 0
    %1288 = vmatpush1.bf16.msra.mxu0 %v224
    %1289 = vmatprep.subr.bf16.mxu0 0
    %1290 = vmatpush1.bf16.msra.mxu0 %v225
    %1291 = vmatprep.subr.bf16.mxu0 0
    %1292 = vmatpush1.bf16.msra.mxu0 0
    %1293 = vmatprep.subr.bf16.mxu0 0
    %1294 = vmatpush1.bf16.msra.mxu0 0
    %1295 = vmatprep.subr.bf16.mxu0 0
    %1296 = vmatpush1.bf16.msra.mxu0 0
    %1297 = vmatprep.subr.bf16.mxu0 0
    %1298 = vmatpush1.bf16.msra.mxu0 0
    %1299 = vmatprep.subr.bf16.mxu0 0
    %1300 = vmatpush1.bf16.msra.mxu0 0
    %1301 = vmatprep.subr.bf16.mxu0 0
    %1302 = vmatpush1.bf16.msra.mxu0 0
    %1303 = vmatprep.subr.bf16.mxu0 0
    %1304 = vmatpush1.bf16.msra.mxu0 0
    %1305 = vmatprep.subr.bf16.mxu0 0
    %1306 = vmatpush1.bf16.msra.mxu0 0
    %1307 = vmatprep.subr.bf16.mxu0 0
    %1308 = vmatpush1.bf16.msra.mxu0 0
    %1309 = vmatprep.subr.bf16.mxu0 0
    %1310 = vmatpush1.bf16.msra.mxu0 0
    %1311 = vmatprep.subr.bf16.mxu0 0
    %1312 = vmatpush1.bf16.msra.mxu0 0
    %1313 = vmatprep.subr.bf16.mxu0 0
    %1314 = vmatpush1.bf16.msra.mxu0 0
    %1315 = vmatprep.mubr.bf16.mxu0 0
    %1316 = vmatmul.mubr.bf16.gmra.mrb[0].mxu0 %v1281
    %v1317 = vpop.f32.mrb[0].mxu0
    %v1318 = vadd.f32 0.0, %v1317
    %v1319 = vpop.f32.mrb[0].mxu0
    %v1320 = vpop.f32.mrb[0].mxu0
    %v1321 = vpop.f32.mrb[0].mxu0
    %1322 = vdwg.mxu0
    %v1323 = vadd.f32 %v1230, %v1318
    %v1324 = vtanh.pop %v1323
    %v1325 = vpack.c.bf16 %v1324, %v1324
    %v1327 = vsel %vm230, %v1325, 0
    %1329 = vmatprep.subr.bf16.mxu0 0
    %1330 = vmatpush1.bf16.msra.mxu0 %v339
    %1331 = vmatprep.subr.bf16.mxu0 0
    %1332 = vmatpush1.bf16.msra.mxu0 %v340
    %1333 = vmatprep.subr.bf16.mxu0 0
    %1334 = vmatpush1.bf16.msra.mxu0 %v341
    %1335 = vmatprep.subr.bf16.mxu0 0
    %1336 = vmatpush1.bf16.msra.mxu0 %v342
    %1337 = vmatprep.subr.bf16.mxu0 0
    %1338 = vmatpush1.bf16.msra.mxu0 0
    %1339 = vmatprep.subr.bf16.mxu0 0
    %1340 = vmatpush1.bf16.msra.mxu0 0
    %1341 = vmatprep.subr.bf16.mxu0 0
    %1342 = vmatpush1.bf16.msra.mxu0 0
    %1343 = vmatprep.subr.bf16.mxu0 0
    %1344 = vmatpush1.bf16.msra.mxu0 0
    %1345 = vmatprep.subr.bf16.mxu0 0
    %1346 = vmatpush1.bf16.msra.mxu0 0
    %1347 = vmatprep.subr.bf16.mxu0 0
    %1348 = vmatpush1.bf16.msra.mxu0 0
    %1349 = vmatprep.subr.bf16.mxu0 0
    %1350 = vmatpush1.bf16.msra.mxu0 0
    %1351 = vmatprep.subr.bf16.mxu0 0
    %1352 = vmatpush1.bf16.msra.mxu0 0
    %1353 = vmatprep.subr.bf16.mxu0 0
    %1354 = vmatpush1.bf16.msra.mxu0 0
    %1355 = vmatprep.subr.bf16.mxu0 0
    %1356 = vmatpush1.bf16.msra.mxu0 0
    %1357 = vmatprep.subr.bf16.mxu0 0
    %1358 = vmatpush1.bf16.msra.mxu0 0
    %1359 = vmatprep.subr.bf16.mxu0 0
    %1360 = vmatpush1.bf16.msra.mxu0 0
    %1361 = vmatprep.mubr.bf16.mxu0 0
    %1362 = vmatmul.mubr.bf16.gmra.mrb[0].mxu0 %v1327
    %v1363 = vpop.f32.mrb[0].mxu0
    %v1364 = vadd.f32 0.0, %v1363
    %v1365 = vpop.f32.mrb[0].mxu0
    %v1366 = vpop.f32.mrb[0].mxu0
    %v1367 = vpop.f32.mrb[0].mxu0
    %1368 = vdwg.mxu0
    %v1369 = vadd.f32 %v1231, %v1364
    %v1370 = vtanh.pop %v1369
    %v1371 = vadd.f32 %v1278, %v1324
    %v1372 = vmul.f32 %v1371, 2.0
    %v1373 = vadd.f32 %v1232, %v1372
    %v1374 = vadd.f32 %v1373, %v1370
    %v1375 = vadd.f32 %v1184, %v1374
    %v1376 = vpack.c.bf16 %v1374, %v1374
    %v1378 = vsel %vm230, %v1376, 0
    %1380 = vmatprep.subr.bf16.mxu0 0
    %1381 = vmatpush1.bf16.msra.mxu0 %v414
    %1382 = vmatprep.subr.bf16.mxu0 0
    %1383 = vmatpush1.bf16.msra.mxu0 %v415
    %1384 = vmatprep.subr.bf16.mxu0 0
    %1385 = vmatpush1.bf16.msra.mxu0 %v416
    %1386 = vmatprep.subr.bf16.mxu0 0
    %1387 = vmatpush1.bf16.msra.mxu0 %v417
    %1388 = vmatprep.subr.bf16.mxu0 0
    %1389 = vmatpush1.bf16.msra.mxu0 0
    %1390 = vmatprep.subr.bf16.mxu0 0
    %1391 = vmatpush1.bf16.msra.mxu0 0
    %1392 = vmatprep.subr.bf16.mxu0 0
    %1393 = vmatpush1.bf16.msra.mxu0 0
    %1394 = vmatprep.subr.bf16.mxu0 0
    %1395 = vmatpush1.bf16.msra.mxu0 0
    %1396 = vmatprep.subr.bf16.mxu0 0
    %1397 = vmatpush1.bf16.msra.mxu0 0
    %1398 = vmatprep.subr.bf16.mxu0 0
    %1399 = vmatpush1.bf16.msra.mxu0 0
    %1400 = vmatprep.subr.bf16.mxu0 0
    %1401 = vmatpush1.bf16.msra.mxu0 0
    %1402 = vmatprep.subr.bf16.mxu0 0
    %1403 = vmatpush1.bf16.msra.mxu0 0
    %1404 = vmatprep.subr.bf16.mxu0 0
    %1405 = vmatpush1.bf16.msra.mxu0 0
    %1406 = vmatprep.subr.bf16.mxu0 0
    %1407 = vmatpush1.bf16.msra.mxu0 0
    %1408 = vmatprep.subr.bf16.mxu0 0
    %1409 = vmatpush1.bf16.msra.mxu0 0
    %1410 = vmatprep.subr.bf16.mxu0 0
    %1411 = vmatpush1.bf16.msra.mxu0 0
    %1412 = vmatprep.mubr.bf16.mxu0 0
    %1413 = vmatmul.mubr.bf16.gmra.mrb[0].mxu0 %v1378
    %v1414 = vpop.f32.mrb[0].mxu0
    %v1415 = vadd.f32 0.0, %v1414
    %v1416 = vpop.f32.mrb[0].mxu0
    %v1417 = vpop.f32.mrb[0].mxu0
    %v1418 = vpop.f32.mrb[0].mxu0
    %1419 = vdwg.mxu0
    %v1420 = vadd.f32 %v1231, %v1415
    %v1421 = vadd.f32 %v1420, %v112
    %v1422 = vadd.f32 %v1420, %v119
    %v1423 = vtanh.pop %v1420
    %v1424 = vpack.c.bf16 %v1423, %v1423
    %v1426 = vsel %vm230, %v1424, 0
    %1428 = vmatprep.subr.bf16.mxu0 0
    %1429 = vmatpush1.bf16.msra.mxu0 %v222
    %1430 = vmatprep.subr.bf16.mxu0 0
    %1431 = vmatpush1.bf16.msra.mxu0 %v223
    %1432 = vmatprep.subr.bf16.mxu0 0
    %1433 = vmatpush1.bf16.msra.mxu0 %v224
    %1434 = vmatprep.subr.bf16.mxu0 0
    %1435 = vmatpush1.bf16.msra.mxu0 %v225
    %1436 = vmatprep.subr.bf16.mxu0 0
    %1437 = vmatpush1.bf16.msra.mxu0 0
    %1438 = vmatprep.subr.bf16.mxu0 0
    %1439 = vmatpush1.bf16.msra.mxu0 0
    %1440 = vmatprep.subr.bf16.mxu0 0
    %1441 = vmatpush1.bf16.msra.mxu0 0
    %1442 = vmatprep.subr.bf16.mxu0 0
    %1443 = vmatpush1.bf16.msra.mxu0 0
    %1444 = vmatprep.subr.bf16.mxu0 0
    %1445 = vmatpush1.bf16.msra.mxu0 0
    %1446 = vmatprep.subr.bf16.mxu0 0
    %1447 = vmatpush1.bf16.msra.mxu0 0
    %1448 = vmatprep.subr.bf16.mxu0 0
    %1449 = vmatpush1.bf16.msra.mxu0 0
    %1450 = vmatprep.subr.bf16.mxu0 0
    %1451 = vmatpush1.bf16.msra.mxu0 0
    %1452 = vmatprep.subr.bf16.mxu0 0
    %1453 = vmatpush1.bf16.msra.mxu0 0
    %1454 = vmatprep.subr.bf16.mxu0 0
    %1455 = vmatpush1.bf16.msra.mxu0 0
    %1456 = vmatprep.subr.bf16.mxu0 0
    %1457 = vmatpush1.bf16.msra.mxu0 0
    %1458 = vmatprep.subr.bf16.mxu0 0
    %1459 = vmatpush1.bf16.msra.mxu0 0
    %1460 = vmatprep.mubr.bf16.mxu0 0
    %1461 = vmatmul.mubr.bf16.gmra.mrb[0].mxu0 %v1426
    %v1462 = vpop.f32.mrb[0].mxu0
    %v1463 = vadd.f32 0.0, %v1462
    %v1464 = vpop.f32.mrb[0].mxu0
    %v1465 = vpop.f32.mrb[0].mxu0
    %v1466 = vpop.f32.mrb[0].mxu0
    %1467 = vdwg.mxu0
    %v1468 = vadd.f32 %v1421, %v1463
    %v1469 = vtanh.pop %v1468
    %v1470 = vpack.c.bf16 %v1469, %v1469
    %v1472 = vsel %vm230, %v1470, 0
    %1474 = vmatprep.subr.bf16.mxu0 0
    %1475 = vmatpush1.bf16.msra.mxu0 %v222
    %1476 = vmatprep.subr.bf16.mxu0 0
    %1477 = vmatpush1.bf16.msra.mxu0 %v223
    %1478 = vmatprep.subr.bf16.mxu0 0
    %1479 = vmatpush1.bf16.msra.mxu0 %v224
    %1480 = vmatprep.subr.bf16.mxu0 0
    %1481 = vmatpush1.bf16.msra.mxu0 %v225
    %1482 = vmatprep.subr.bf16.mxu0 0
    %1483 = vmatpush1.bf16.msra.mxu0 0
    %1484 = vmatprep.subr.bf16.mxu0 0
    %1485 = vmatpush1.bf16.msra.mxu0 0
    %1486 = vmatprep.subr.bf16.mxu0 0
    %1487 = vmatpush1.bf16.msra.mxu0 0
    %1488 = vmatprep.subr.bf16.mxu0 0
    %1489 = vmatpush1.bf16.msra.mxu0 0
    %1490 = vmatprep.subr.bf16.mxu0 0
    %1491 = vmatpush1.bf16.msra.mxu0 0
    %1492 = vmatprep.subr.bf16.mxu0 0
    %1493 = vmatpush1.bf16.msra.mxu0 0
    %1494 = vmatprep.subr.bf16.mxu0 0
    %1495 = vmatpush1.bf16.msra.mxu0 0
    %1496 = vmatprep.subr.bf16.mxu0 0
    %1497 = vmatpush1.bf16.msra.mxu0 0
    %1498 = vmatprep.subr.bf16.mxu0 0
    %1499 = vmatpush1.bf16.msra.mxu0 0
    %1500 = vmatprep.subr.bf16.mxu0 0
    %1501 = vmatpush1.bf16.msra.mxu0 0
    %1502 = vmatprep.subr.bf16.mxu0 0
    %1503 = vmatpush1.bf16.msra.mxu0 0
    %1504 = vmatprep.subr.bf16.mxu0 0
    %1505 = vmatpush1.bf16.msra.mxu0 0
    %1506 = vmatprep.mubr.bf16.mxu0 0
    %1507 = vmatmul.mubr.bf16.gmra.mrb[0].mxu0 %v1472
    %v1508 = vpop.f32.mrb[0].mxu0
    %v1509 = vadd.f32 0.0, %v1508
    %v1510 = vpop.f32.mrb[0].mxu0
    %v1511 = vpop.f32.mrb[0].mxu0
    %v1512 = vpop.f32.mrb[0].mxu0
    %1513 = vdwg.mxu0
    %v1514 = vadd.f32 %v1421, %v1509
    %v1515 = vtanh.pop %v1514
    %v1516 = vpack.c.bf16 %v1515, %v1515
    %v1518 = vsel %vm230, %v1516, 0
    %1520 = vmatprep.subr.bf16.mxu0 0
    %1521 = vmatpush1.bf16.msra.mxu0 %v339
    %1522 = vmatprep.subr.bf16.mxu0 0
    %1523 = vmatpush1.bf16.msra.mxu0 %v340
    %1524 = vmatprep.subr.bf16.mxu0 0
    %1525 = vmatpush1.bf16.msra.mxu0 %v341
    %1526 = vmatprep.subr.bf16.mxu0 0
    %1527 = vmatpush1.bf16.msra.mxu0 %v342
    %1528 = vmatprep.subr.bf16.mxu0 0
    %1529 = vmatpush1.bf16.msra.mxu0 0
    %1530 = vmatprep.subr.bf16.mxu0 0
    %1531 = vmatpush1.bf16.msra.mxu0 0
    %1532 = vmatprep.subr.bf16.mxu0 0
    %1533 = vmatpush1.bf16.msra.mxu0 0
    %1534 = vmatprep.subr.bf16.mxu0 0
    %1535 = vmatpush1.bf16.msra.mxu0 0
    %1536 = vmatprep.subr.bf16.mxu0 0
    %1537 = vmatpush1.bf16.msra.mxu0 0
    %1538 = vmatprep.subr.bf16.mxu0 0
    %1539 = vmatpush1.bf16.msra.mxu0 0
    %1540 = vmatprep.subr.bf16.mxu0 0
    %1541 = vmatpush1.bf16.msra.mxu0 0
    %1542 = vmatprep.subr.bf16.mxu0 0
    %1543 = vmatpush1.bf16.msra.mxu0 0
    %1544 = vmatprep.subr.bf16.mxu0 0
    %1545 = vmatpush1.bf16.msra.mxu0 0
    %1546 = vmatprep.subr.bf16.mxu0 0
    %1547 = vmatpush1.bf16.msra.mxu0 0
    %1548 = vmatprep.subr.bf16.mxu0 0
    %1549 = vmatpush1.bf16.msra.mxu0 0
    %1550 = vmatprep.subr.bf16.mxu0 0
    %1551 = vmatpush1.bf16.msra.mxu0 0
    %1552 = vmatprep.mubr.bf16.mxu0 0
    %1553 = vmatmul.mubr.bf16.gmra.mrb[0].mxu0 %v1518
    %v1554 = vpop.f32.mrb[0].mxu0
    %v1555 = vadd.f32 0.0, %v1554
    %v1556 = vpop.f32.mrb[0].mxu0
    %v1557 = vpop.f32.mrb[0].mxu0
    %v1558 = vpop.f32.mrb[0].mxu0
    %1559 = vdwg.mxu0
    %v1560 = vadd.f32 %v1422, %v1555
    %v1561 = vtanh.pop %v1560
    %v1562 = vadd.f32 %v1469, %v1515
    %v1563 = vmul.f32 %v1562, 2.0
    %v1564 = vadd.f32 %v1423, %v1563
    %v1565 = vadd.f32 %v1564, %v1561
    %v1566 = vadd.f32 %v1375, %v1565
    %v1567 = vpack.c.bf16 %v1565, %v1565
    %v1569 = vsel %vm230, %v1567, 0
    %1571 = vmatprep.subr.bf16.mxu0 0
    %1572 = vmatpush1.bf16.msra.mxu0 %v414
    %1573 = vmatprep.subr.bf16.mxu0 0
    %1574 = vmatpush1.bf16.msra.mxu0 %v415
    %1575 = vmatprep.subr.bf16.mxu0 0
    %1576 = vmatpush1.bf16.msra.mxu0 %v416
    %1577 = vmatprep.subr.bf16.mxu0 0
    %1578 = vmatpush1.bf16.msra.mxu0 %v417
    %1579 = vmatprep.subr.bf16.mxu0 0
    %1580 = vmatpush1.bf16.msra.mxu0 0
    %1581 = vmatprep.subr.bf16.mxu0 0
    %1582 = vmatpush1.bf16.msra.mxu0 0
    %1583 = vmatprep.subr.bf16.mxu0 0
    %1584 = vmatpush1.bf16.msra.mxu0 0
    %1585 = vmatprep.subr.bf16.mxu0 0
    %1586 = vmatpush1.bf16.msra.mxu0 0
    %1587 = vmatprep.subr.bf16.mxu0 0
    %1588 = vmatpush1.bf16.msra.mxu0 0
    %1589 = vmatprep.subr.bf16.mxu0 0
    %1590 = vmatpush1.bf16.msra.mxu0 0
    %1591 = vmatprep.subr.bf16.mxu0 0
    %1592 = vmatpush1.bf16.msra.mxu0 0
    %1593 = vmatprep.subr.bf16.mxu0 0
    %1594 = vmatpush1.bf16.msra.mxu0 0
    %1595 = vmatprep.subr.bf16.mxu0 0
    %1596 = vmatpush1.bf16.msra.mxu0 0
    %1597 = vmatprep.subr.bf16.mxu0 0
    %1598 = vmatpush1.bf16.msra.mxu0 0
    %1599 = vmatprep.subr.bf16.mxu0 0
    %1600 = vmatpush1.bf16.msra.mxu0 0
    %1601 = vmatprep.subr.bf16.mxu0 0
    %1602 = vmatpush1.bf16.msra.mxu0 0
    %1603 = vmatprep.mubr.bf16.mxu0 0
    %1604 = vmatmul.mubr.bf16.gmra.mrb[0].mxu0 %v1569
    %v1605 = vpop.f32.mrb[0].mxu0
    %v1606 = vadd.f32 0.0, %v1605
    %v1607 = vpop.f32.mrb[0].mxu0
    %v1608 = vpop.f32.mrb[0].mxu0
    %v1609 = vpop.f32.mrb[0].mxu0
    %1610 = vdwg.mxu0
    %v1611 = vadd.f32 %v1422, %v1606
    %v1612 = vadd.f32 %v1611, %v112
    %v1613 = vadd.f32 %v1611, %v119
    %v1614 = vtanh.pop %v1611
    %v1615 = vpack.c.bf16 %v1614, %v1614
    %v1617 = vsel %vm230, %v1615, 0
    %1619 = vmatprep.subr.bf16.mxu0 0
    %1620 = vmatpush1.bf16.msra.mxu0 %v222
    %1621 = vmatprep.subr.bf16.mxu0 0
    %1622 = vmatpush1.bf16.msra.mxu0 %v223
    %1623 = vmatprep.subr.bf16.mxu0 0
    %1624 = vmatpush1.bf16.msra.mxu0 %v224
    %1625 = vmatprep.subr.bf16.mxu0 0
    %1626 = vmatpush1.bf16.msra.mxu0 %v225
    %1627 = vmatprep.subr.bf16.mxu0 0
    %1628 = vmatpush1.bf16.msra.mxu0 0
    %1629 = vmatprep.subr.bf16.mxu0 0
    %1630 = vmatpush1.bf16.msra.mxu0 0
    %1631 = vmatprep.subr.bf16.mxu0 0
    %1632 = vmatpush1.bf16.msra.mxu0 0
    %1633 = vmatprep.subr.bf16.mxu0 0
    %1634 = vmatpush1.bf16.msra.mxu0 0
    %1635 = vmatprep.subr.bf16.mxu0 0
    %1636 = vmatpush1.bf16.msra.mxu0 0
    %1637 = vmatprep.subr.bf16.mxu0 0
    %1638 = vmatpush1.bf16.msra.mxu0 0
    %1639 = vmatprep.subr.bf16.mxu0 0
    %1640 = vmatpush1.bf16.msra.mxu0 0
    %1641 = vmatprep.subr.bf16.mxu0 0
    %1642 = vmatpush1.bf16.msra.mxu0 0
    %1643 = vmatprep.subr.bf16.mxu0 0
    %1644 = vmatpush1.bf16.msra.mxu0 0
    %1645 = vmatprep.subr.bf16.mxu0 0
    %1646 = vmatpush1.bf16.msra.mxu0 0
    %1647 = vmatprep.subr.bf16.mxu0 0
    %1648 = vmatpush1.bf16.msra.mxu0 0
    %1649 = vmatprep.subr.bf16.mxu0 0
    %1650 = vmatpush1.bf16.msra.mxu0 0
    %1651 = vmatprep.mubr.bf16.mxu0 0
    %1652 = vmatmul.mubr.bf16.gmra.mrb[0].mxu0 %v1617
    %v1653 = vpop.f32.mrb[0].mxu0
    %v1654 = vadd.f32 0.0, %v1653
    %v1655 = vpop.f32.mrb[0].mxu0
    %v1656 = vpop.f32.mrb[0].mxu0
    %v1657 = vpop.f32.mrb[0].mxu0
    %1658 = vdwg.mxu0
    %v1659 = vadd.f32 %v1612, %v1654
    %v1660 = vtanh.pop %v1659
    %v1661 = vpack.c.bf16 %v1660, %v1660
    %v1663 = vsel %vm230, %v1661, 0
    %1665 = vmatprep.subr.bf16.mxu0 0
    %1666 = vmatpush1.bf16.msra.mxu0 %v222
    %1667 = vmatprep.subr.bf16.mxu0 0
    %1668 = vmatpush1.bf16.msra.mxu0 %v223
    %1669 = vmatprep.subr.bf16.mxu0 0
    %1670 = vmatpush1.bf16.msra.mxu0 %v224
    %1671 = vmatprep.subr.bf16.mxu0 0
    %1672 = vmatpush1.bf16.msra.mxu0 %v225
    %1673 = vmatprep.subr.bf16.mxu0 0
    %1674 = vmatpush1.bf16.msra.mxu0 0
    %1675 = vmatprep.subr.bf16.mxu0 0
    %1676 = vmatpush1.bf16.msra.mxu0 0
    %1677 = vmatprep.subr.bf16.mxu0 0
    %1678 = vmatpush1.bf16.msra.mxu0 0
    %1679 = vmatprep.subr.bf16.mxu0 0
    %1680 = vmatpush1.bf16.msra.mxu0 0
    %1681 = vmatprep.subr.bf16.mxu0 0
    %1682 = vmatpush1.bf16.msra.mxu0 0
    %1683 = vmatprep.subr.bf16.mxu0 0
    %1684 = vmatpush1.bf16.msra.mxu0 0
    %1685 = vmatprep.subr.bf16.mxu0 0
    %1686 = vmatpush1.bf16.msra.mxu0 0
    %1687 = vmatprep.subr.bf16.mxu0 0
    %1688 = vmatpush1.bf16.msra.mxu0 0
    %1689 = vmatprep.subr.bf16.mxu0 0
    %1690 = vmatpush1.bf16.msra.mxu0 0
    %1691 = vmatprep.subr.bf16.mxu0 0
    %1692 = vmatpush1.bf16.msra.mxu0 0
    %1693 = vmatprep.subr.bf16.mxu0 0
    %1694 = vmatpush1.bf16.msra.mxu0 0
    %1695 = vmatprep.subr.bf16.mxu0 0
    %1696 = vmatpush1.bf16.msra.mxu0 0
    %1697 = vmatprep.mubr.bf16.mxu0 0
    %1698 = vmatmul.mubr.bf16.gmra.mrb[0].mxu0 %v1663
    %v1699 = vpop.f32.mrb[0].mxu0
    %v1700 = vadd.f32 0.0, %v1699
    %v1701 = vpop.f32.mrb[0].mxu0
    %v1702 = vpop.f32.mrb[0].mxu0
    %v1703 = vpop.f32.mrb[0].mxu0
    %1704 = vdwg.mxu0
    %v1705 = vadd.f32 %v1612, %v1700
    %v1706 = vtanh.pop %v1705
    %v1707 = vpack.c.bf16 %v1706, %v1706
    %v1709 = vsel %vm230, %v1707, 0
    %1711 = vmatprep.subr.bf16.mxu0 0
    %1712 = vmatpush1.bf16.msra.mxu0 %v339
    %1713 = vmatprep.subr.bf16.mxu0 0
    %1714 = vmatpush1.bf16.msra.mxu0 %v340
    %1715 = vmatprep.subr.bf16.mxu0 0
    %1716 = vmatpush1.bf16.msra.mxu0 %v341
    %1717 = vmatprep.subr.bf16.mxu0 0
    %1718 = vmatpush1.bf16.msra.mxu0 %v342
    %1719 = vmatprep.subr.bf16.mxu0 0
    %1720 = vmatpush1.bf16.msra.mxu0 0
    %1721 = vmatprep.subr.bf16.mxu0 0
    %1722 = vmatpush1.bf16.msra.mxu0 0
    %1723 = vmatprep.subr.bf16.mxu0 0
    %1724 = vmatpush1.bf16.msra.mxu0 0
    %1725 = vmatprep.subr.bf16.mxu0 0
    %1726 = vmatpush1.bf16.msra.mxu0 0
    %1727 = vmatprep.subr.bf16.mxu0 0
    %1728 = vmatpush1.bf16.msra.mxu0 0
    %1729 = vmatprep.subr.bf16.mxu0 0
    %1730 = vmatpush1.bf16.msra.mxu0 0
    %1731 = vmatprep.subr.bf16.mxu0 0
    %1732 = vmatpush1.bf16.msra.mxu0 0
    %1733 = vmatprep.subr.bf16.mxu0 0
    %1734 = vmatpush1.bf16.msra.mxu0 0
    %1735 = vmatprep.subr.bf16.mxu0 0
    %1736 = vmatpush1.bf16.msra.mxu0 0
    %1737 = vmatprep.subr.bf16.mxu0 0
    %1738 = vmatpush1.bf16.msra.mxu0 0
    %1739 = vmatprep.subr.bf16.mxu0 0
    %1740 = vmatpush1.bf16.msra.mxu0 0
    %1741 = vmatprep.subr.bf16.mxu0 0
    %1742 = vmatpush1.bf16.msra.mxu0 0
    %1743 = vmatprep.mubr.bf16.mxu0 0
    %1744 = vmatmul.mubr.bf16.gmra.mrb[0].mxu0 %v1709
    %v1745 = vpop.f32.mrb[0].mxu0
    %v1746 = vadd.f32 0.0, %v1745
    %v1747 = vpop.f32.mrb[0].mxu0
    %v1748 = vpop.f32.mrb[0].mxu0
    %v1749 = vpop.f32.mrb[0].mxu0
    %1750 = vdwg.mxu0
    %v1751 = vadd.f32 %v1613, %v1746
    %v1752 = vtanh.pop %v1751
    %v1753 = vadd.f32 %v1660, %v1706
    %v1754 = vmul.f32 %v1753, 2.0
    %v1755 = vadd.f32 %v1614, %v1754
    %v1756 = vadd.f32 %v1755, %v1752
    %v1757 = vadd.f32 %v1566, %v1756
    %v1758 = vpack.c.bf16 %v1756, %v1756
    %v1760 = vsel %vm230, %v1758, 0
    %1762 = vmatprep.subr.bf16.mxu0 0
    %1763 = vmatpush1.bf16.msra.mxu0 %v414
    %1764 = vmatprep.subr.bf16.mxu0 0
    %1765 = vmatpush1.bf16.msra.mxu0 %v415
    %1766 = vmatprep.subr.bf16.mxu0 0
    %1767 = vmatpush1.bf16.msra.mxu0 %v416
    %1768 = vmatprep.subr.bf16.mxu0 0
    %1769 = vmatpush1.bf16.msra.mxu0 %v417
    %1770 = vmatprep.subr.bf16.mxu0 0
    %1771 = vmatpush1.bf16.msra.mxu0 0
    %1772 = vmatprep.subr.bf16.mxu0 0
    %1773 = vmatpush1.bf16.msra.mxu0 0
    %1774 = vmatprep.subr.bf16.mxu0 0
    %1775 = vmatpush1.bf16.msra.mxu0 0
    %1776 = vmatprep.subr.bf16.mxu0 0
    %1777 = vmatpush1.bf16.msra.mxu0 0
    %1778 = vmatprep.subr.bf16.mxu0 0
    %1779 = vmatpush1.bf16.msra.mxu0 0
    %1780 = vmatprep.subr.bf16.mxu0 0
    %1781 = vmatpush1.bf16.msra.mxu0 0
    %1782 = vmatprep.subr.bf16.mxu0 0
    %1783 = vmatpush1.bf16.msra.mxu0 0
    %1784 = vmatprep.subr.bf16.mxu0 0
    %1785 = vmatpush1.bf16.msra.mxu0 0
    %1786 = vmatprep.subr.bf16.mxu0 0
    %1787 = vmatpush1.bf16.msra.mxu0 0
    %1788 = vmatprep.subr.bf16.mxu0 0
    %1789 = vmatpush1.bf16.msra.mxu0 0
    %1790 = vmatprep.subr.bf16.mxu0 0
    %1791 = vmatpush1.bf16.msra.mxu0 0
    %1792 = vmatprep.subr.bf16.mxu0 0
    %1793 = vmatpush1.bf16.msra.mxu0 0
    %1794 = vmatprep.mubr.bf16.mxu0 0
    %1795 = vmatmul.mubr.bf16.gmra.mrb[0].mxu0 %v1760
    %v1796 = vpop.f32.mrb[0].mxu0
    %v1797 = vadd.f32 0.0, %v1796
    %v1798 = vpop.f32.mrb[0].mxu0
    %v1799 = vpop.f32.mrb[0].mxu0
    %v1800 = vpop.f32.mrb[0].mxu0
    %1801 = vdwg.mxu0
    %v1802 = vadd.f32 %v1613, %v1797
    %v1803 = vadd.f32 %v1802, %v112
    %v1804 = vadd.f32 %v1802, %v119
    %v1805 = vtanh.pop %v1802
    %v1806 = vpack.c.bf16 %v1805, %v1805
    %v1808 = vsel %vm230, %v1806, 0
    %1810 = vmatprep.subr.bf16.mxu0 0
    %1811 = vmatpush1.bf16.msra.mxu0 %v222
    %1812 = vmatprep.subr.bf16.mxu0 0
    %1813 = vmatpush1.bf16.msra.mxu0 %v223
    %1814 = vmatprep.subr.bf16.mxu0 0
    %1815 = vmatpush1.bf16.msra.mxu0 %v224
    %1816 = vmatprep.subr.bf16.mxu0 0
    %1817 = vmatpush1.bf16.msra.mxu0 %v225
    %1818 = vmatprep.subr.bf16.mxu0 0
    %1819 = vmatpush1.bf16.msra.mxu0 0
    %1820 = vmatprep.subr.bf16.mxu0 0
    %1821 = vmatpush1.bf16.msra.mxu0 0
    %1822 = vmatprep.subr.bf16.mxu0 0
    %1823 = vmatpush1.bf16.msra.mxu0 0
    %1824 = vmatprep.subr.bf16.mxu0 0
    %1825 = vmatpush1.bf16.msra.mxu0 0
    %1826 = vmatprep.subr.bf16.mxu0 0
    %1827 = vmatpush1.bf16.msra.mxu0 0
    %1828 = vmatprep.subr.bf16.mxu0 0
    %1829 = vmatpush1.bf16.msra.mxu0 0
    %1830 = vmatprep.subr.bf16.mxu0 0
    %1831 = vmatpush1.bf16.msra.mxu0 0
    %1832 = vmatprep.subr.bf16.mxu0 0
    %1833 = vmatpush1.bf16.msra.mxu0 0
    %1834 = vmatprep.subr.bf16.mxu0 0
    %1835 = vmatpush1.bf16.msra.mxu0 0
    %1836 = vmatprep.subr.bf16.mxu0 0
    %1837 = vmatpush1.bf16.msra.mxu0 0
    %1838 = vmatprep.subr.bf16.mxu0 0
    %1839 = vmatpush1.bf16.msra.mxu0 0
    %1840 = vmatprep.subr.bf16.mxu0 0
    %1841 = vmatpush1.bf16.msra.mxu0 0
    %1842 = vmatprep.mubr.bf16.mxu0 0
    %1843 = vmatmul.mubr.bf16.gmra.mrb[0].mxu0 %v1808
    %v1844 = vpop.f32.mrb[0].mxu0
    %v1845 = vadd.f32 0.0, %v1844
    %v1846 = vpop.f32.mrb[0].mxu0
    %v1847 = vpop.f32.mrb[0].mxu0
    %v1848 = vpop.f32.mrb[0].mxu0
    %1849 = vdwg.mxu0
    %v1850 = vadd.f32 %v1803, %v1845
    %v1851 = vtanh.pop %v1850
    %v1852 = vpack.c.bf16 %v1851, %v1851
    %v1854 = vsel %vm230, %v1852, 0
    %1856 = vmatprep.subr.bf16.mxu0 0
    %1857 = vmatpush1.bf16.msra.mxu0 %v222
    %1858 = vmatprep.subr.bf16.mxu0 0
    %1859 = vmatpush1.bf16.msra.mxu0 %v223
    %1860 = vmatprep.subr.bf16.mxu0 0
    %1861 = vmatpush1.bf16.msra.mxu0 %v224
    %1862 = vmatprep.subr.bf16.mxu0 0
    %1863 = vmatpush1.bf16.msra.mxu0 %v225
    %1864 = vmatprep.subr.bf16.mxu0 0
    %1865 = vmatpush1.bf16.msra.mxu0 0
    %1866 = vmatprep.subr.bf16.mxu0 0
    %1867 = vmatpush1.bf16.msra.mxu0 0
    %1868 = vmatprep.subr.bf16.mxu0 0
    %1869 = vmatpush1.bf16.msra.mxu0 0
    %1870 = vmatprep.subr.bf16.mxu0 0
    %1871 = vmatpush1.bf16.msra.mxu0 0
    %1872 = vmatprep.subr.bf16.mxu0 0
    %1873 = vmatpush1.bf16.msra.mxu0 0
    %1874 = vmatprep.subr.bf16.mxu0 0
    %1875 = vmatpush1.bf16.msra.mxu0 0
    %1876 = vmatprep.subr.bf16.mxu0 0
    %1877 = vmatpush1.bf16.msra.mxu0 0
    %1878 = vmatprep.subr.bf16.mxu0 0
    %1879 = vmatpush1.bf16.msra.mxu0 0
    %1880 = vmatprep.subr.bf16.mxu0 0
    %1881 = vmatpush1.bf16.msra.mxu0 0
    %1882 = vmatprep.subr.bf16.mxu0 0
    %1883 = vmatpush1.bf16.msra.mxu0 0
    %1884 = vmatprep.subr.bf16.mxu0 0
    %1885 = vmatpush1.bf16.msra.mxu0 0
    %1886 = vmatprep.subr.bf16.mxu0 0
    %1887 = vmatpush1.bf16.msra.mxu0 0
    %1888 = vmatprep.mubr.bf16.mxu0 0
    %1889 = vmatmul.mubr.bf16.gmra.mrb[0].mxu0 %v1854
    %v1890 = vpop.f32.mrb[0].mxu0
    %v1891 = vadd.f32 0.0, %v1890
    %v1892 = vpop.f32.mrb[0].mxu0
    %v1893 = vpop.f32.mrb[0].mxu0
    %v1894 = vpop.f32.mrb[0].mxu0
    %1895 = vdwg.mxu0
    %v1896 = vadd.f32 %v1803, %v1891
    %v1897 = vtanh.pop %v1896
    %v1898 = vpack.c.bf16 %v1897, %v1897
    %v1900 = vsel %vm230, %v1898, 0
    %1902 = vmatprep.subr.bf16.mxu0 0
    %1903 = vmatpush1.bf16.msra.mxu0 %v339
    %1904 = vmatprep.subr.bf16.mxu0 0
    %1905 = vmatpush1.bf16.msra.mxu0 %v340
    %1906 = vmatprep.subr.bf16.mxu0 0
    %1907 = vmatpush1.bf16.msra.mxu0 %v341
    %1908 = vmatprep.subr.bf16.mxu0 0
    %1909 = vmatpush1.bf16.msra.mxu0 %v342
    %1910 = vmatprep.subr.bf16.mxu0 0
    %1911 = vmatpush1.bf16.msra.mxu0 0
    %1912 = vmatprep.subr.bf16.mxu0 0
    %1913 = vmatpush1.bf16.msra.mxu0 0
    %1914 = vmatprep.subr.bf16.mxu0 0
    %1915 = vmatpush1.bf16.msra.mxu0 0
    %1916 = vmatprep.subr.bf16.mxu0 0
    %1917 = vmatpush1.bf16.msra.mxu0 0
    %1918 = vmatprep.subr.bf16.mxu0 0
    %1919 = vmatpush1.bf16.msra.mxu0 0
    %1920 = vmatprep.subr.bf16.mxu0 0
    %1921 = vmatpush1.bf16.msra.mxu0 0
    %1922 = vmatprep.subr.bf16.mxu0 0
    %1923 = vmatpush1.bf16.msra.mxu0 0
    %1924 = vmatprep.subr.bf16.mxu0 0
    %1925 = vmatpush1.bf16.msra.mxu0 0
    %1926 = vmatprep.subr.bf16.mxu0 0
    %1927 = vmatpush1.bf16.msra.mxu0 0
    %1928 = vmatprep.subr.bf16.mxu0 0
    %1929 = vmatpush1.bf16.msra.mxu0 0
    %1930 = vmatprep.subr.bf16.mxu0 0
    %1931 = vmatpush1.bf16.msra.mxu0 0
    %1932 = vmatprep.subr.bf16.mxu0 0
    %1933 = vmatpush1.bf16.msra.mxu0 0
    %1934 = vmatprep.mubr.bf16.mxu0 0
    %1935 = vmatmul.mubr.bf16.gmra.mrb[0].mxu0 %v1900
    %v1936 = vpop.f32.mrb[0].mxu0
    %v1937 = vadd.f32 0.0, %v1936
    %v1938 = vpop.f32.mrb[0].mxu0
    %v1939 = vpop.f32.mrb[0].mxu0
    %v1940 = vpop.f32.mrb[0].mxu0
    %1941 = vdwg.mxu0
    %v1942 = vadd.f32 %v1804, %v1937
    %v1943 = vtanh.pop %v1942
    %v1944 = vadd.f32 %v1851, %v1897
    %v1945 = vmul.f32 %v1944, 2.0
    %v1946 = vadd.f32 %v1805, %v1945
    %v1947 = vadd.f32 %v1946, %v1943
    %v1948 = vadd.f32 %v1757, %v1947
    %v1949 = vpack.c.bf16 %v1947, %v1947
    %v1951 = vsel %vm230, %v1949, 0
    %1953 = vmatprep.subr.bf16.mxu0 0
    %1954 = vmatpush1.bf16.msra.mxu0 %v414
    %1955 = vmatprep.subr.bf16.mxu0 0
    %1956 = vmatpush1.bf16.msra.mxu0 %v415
    %1957 = vmatprep.subr.bf16.mxu0 0
    %1958 = vmatpush1.bf16.msra.mxu0 %v416
    %1959 = vmatprep.subr.bf16.mxu0 0
    %1960 = vmatpush1.bf16.msra.mxu0 %v417
    %1961 = vmatprep.subr.bf16.mxu0 0
    %1962 = vmatpush1.bf16.msra.mxu0 0
    %1963 = vmatprep.subr.bf16.mxu0 0
    %1964 = vmatpush1.bf16.msra.mxu0 0
    %1965 = vmatprep.subr.bf16.mxu0 0
    %1966 = vmatpush1.bf16.msra.mxu0 0
    %1967 = vmatprep.subr.bf16.mxu0 0
    %1968 = vmatpush1.bf16.msra.mxu0 0
    %1969 = vmatprep.subr.bf16.mxu0 0
    %1970 = vmatpush1.bf16.msra.mxu0 0
    %1971 = vmatprep.subr.bf16.mxu0 0
    %1972 = vmatpush1.bf16.msra.mxu0 0
    %1973 = vmatprep.subr.bf16.mxu0 0
    %1974 = vmatpush1.bf16.msra.mxu0 0
    %1975 = vmatprep.subr.bf16.mxu0 0
    %1976 = vmatpush1.bf16.msra.mxu0 0
    %1977 = vmatprep.subr.bf16.mxu0 0
    %1978 = vmatpush1.bf16.msra.mxu0 0
    %1979 = vmatprep.subr.bf16.mxu0 0
    %1980 = vmatpush1.bf16.msra.mxu0 0
    %1981 = vmatprep.subr.bf16.mxu0 0
    %1982 = vmatpush1.bf16.msra.mxu0 0
    %1983 = vmatprep.subr.bf16.mxu0 0
    %1984 = vmatpush1.bf16.msra.mxu0 0
    %1985 = vmatprep.mubr.bf16.mxu0 0
    %1986 = vmatmul.mubr.bf16.gmra.mrb[0].mxu0 %v1951
    %v1987 = vpop.f32.mrb[0].mxu0
    %v1988 = vadd.f32 0.0, %v1987
    %v1989 = vpop.f32.mrb[0].mxu0
    %v1990 = vpop.f32.mrb[0].mxu0
    %v1991 = vpop.f32.mrb[0].mxu0
    %1992 = vdwg.mxu0
    %v1993 = vadd.f32 %v1804, %v1988
    %v1994 = vadd.f32 %v1993, %v112
    %v1995 = vadd.f32 %v1993, %v119
    %v1996 = vtanh.pop %v1993
    %v1997 = vpack.c.bf16 %v1996, %v1996
    %v1999 = vsel %vm230, %v1997, 0
    %2001 = vmatprep.subr.bf16.mxu0 0
    %2002 = vmatpush1.bf16.msra.mxu0 %v222
    %2003 = vmatprep.subr.bf16.mxu0 0
    %2004 = vmatpush1.bf16.msra.mxu0 %v223
    %2005 = vmatprep.subr.bf16.mxu0 0
    %2006 = vmatpush1.bf16.msra.mxu0 %v224
    %2007 = vmatprep.subr.bf16.mxu0 0
    %2008 = vmatpush1.bf16.msra.mxu0 %v225
    %2009 = vmatprep.subr.bf16.mxu0 0
    %2010 = vmatpush1.bf16.msra.mxu0 0
    %2011 = vmatprep.subr.bf16.mxu0 0
    %2012 = vmatpush1.bf16.msra.mxu0 0
    %2013 = vmatprep.subr.bf16.mxu0 0
    %2014 = vmatpush1.bf16.msra.mxu0 0
    %2015 = vmatprep.subr.bf16.mxu0 0
    %2016 = vmatpush1.bf16.msra.mxu0 0
    %2017 = vmatprep.subr.bf16.mxu0 0
    %2018 = vmatpush1.bf16.msra.mxu0 0
    %2019 = vmatprep.subr.bf16.mxu0 0
    %2020 = vmatpush1.bf16.msra.mxu0 0
    %2021 = vmatprep.subr.bf16.mxu0 0
    %2022 = vmatpush1.bf16.msra.mxu0 0
    %2023 = vmatprep.subr.bf16.mxu0 0
    %2024 = vmatpush1.bf16.msra.mxu0 0
    %2025 = vmatprep.subr.bf16.mxu0 0
    %2026 = vmatpush1.bf16.msra.mxu0 0
    %2027 = vmatprep.subr.bf16.mxu0 0
    %2028 = vmatpush1.bf16.msra.mxu0 0
    %2029 = vmatprep.subr.bf16.mxu0 0
    %2030 = vmatpush1.bf16.msra.mxu0 0
    %2031 = vmatprep.subr.bf16.mxu0 0
    %2032 = vmatpush1.bf16.msra.mxu0 0
    %2033 = vmatprep.mubr.bf16.mxu0 0
    %2034 = vmatmul.mubr.bf16.gmra.mrb[0].mxu0 %v1999
    %v2035 = vpop.f32.mrb[0].mxu0
    %v2036 = vadd.f32 0.0, %v2035
    %v2037 = vpop.f32.mrb[0].mxu0
    %v2038 = vpop.f32.mrb[0].mxu0
    %v2039 = vpop.f32.mrb[0].mxu0
    %2040 = vdwg.mxu0
    %v2041 = vadd.f32 %v1994, %v2036
    %v2042 = vtanh.pop %v2041
    %v2043 = vpack.c.bf16 %v2042, %v2042
    %v2045 = vsel %vm230, %v2043, 0
    %2047 = vmatprep.subr.bf16.mxu0 0
    %2048 = vmatpush1.bf16.msra.mxu0 %v222
    %2049 = vmatprep.subr.bf16.mxu0 0
    %2050 = vmatpush1.bf16.msra.mxu0 %v223
    %2051 = vmatprep.subr.bf16.mxu0 0
    %2052 = vmatpush1.bf16.msra.mxu0 %v224
    %2053 = vmatprep.subr.bf16.mxu0 0
    %2054 = vmatpush1.bf16.msra.mxu0 %v225
    %2055 = vmatprep.subr.bf16.mxu0 0
    %2056 = vmatpush1.bf16.msra.mxu0 0
    %2057 = vmatprep.subr.bf16.mxu0 0
    %2058 = vmatpush1.bf16.msra.mxu0 0
    %2059 = vmatprep.subr.bf16.mxu0 0
    %2060 = vmatpush1.bf16.msra.mxu0 0
    %2061 = vmatprep.subr.bf16.mxu0 0
    %2062 = vmatpush1.bf16.msra.mxu0 0
    %2063 = vmatprep.subr.bf16.mxu0 0
    %2064 = vmatpush1.bf16.msra.mxu0 0
    %2065 = vmatprep.subr.bf16.mxu0 0
    %2066 = vmatpush1.bf16.msra.mxu0 0
    %2067 = vmatprep.subr.bf16.mxu0 0
    %2068 = vmatpush1.bf16.msra.mxu0 0
    %2069 = vmatprep.subr.bf16.mxu0 0
    %2070 = vmatpush1.bf16.msra.mxu0 0
    %2071 = vmatprep.subr.bf16.mxu0 0
    %2072 = vmatpush1.bf16.msra.mxu0 0
    %2073 = vmatprep.subr.bf16.mxu0 0
    %2074 = vmatpush1.bf16.msra.mxu0 0
    %2075 = vmatprep.subr.bf16.mxu0 0
    %2076 = vmatpush1.bf16.msra.mxu0 0
    %2077 = vmatprep.subr.bf16.mxu0 0
    %2078 = vmatpush1.bf16.msra.mxu0 0
    %2079 = vmatprep.mubr.bf16.mxu0 0
    %2080 = vmatmul.mubr.bf16.gmra.mrb[0].mxu0 %v2045
    %v2081 = vpop.f32.mrb[0].mxu0
    %v2082 = vadd.f32 0.0, %v2081
    %v2083 = vpop.f32.mrb[0].mxu0
    %v2084 = vpop.f32.mrb[0].mxu0
    %v2085 = vpop.f32.mrb[0].mxu0
    %2086 = vdwg.mxu0
    %v2087 = vadd.f32 %v1994, %v2082
    %v2088 = vtanh.pop %v2087
    %v2089 = vpack.c.bf16 %v2088, %v2088
    %v2091 = vsel %vm230, %v2089, 0
    %2093 = vmatprep.subr.bf16.mxu0 0
    %2094 = vmatpush1.bf16.msra.mxu0 %v339
    %2095 = vmatprep.subr.bf16.mxu0 0
    %2096 = vmatpush1.bf16.msra.mxu0 %v340
    %2097 = vmatprep.subr.bf16.mxu0 0
    %2098 = vmatpush1.bf16.msra.mxu0 %v341
    %2099 = vmatprep.subr.bf16.mxu0 0
    %2100 = vmatpush1.bf16.msra.mxu0 %v342
    %2101 = vmatprep.subr.bf16.mxu0 0
    %2102 = vmatpush1.bf16.msra.mxu0 0
    %2103 = vmatprep.subr.bf16.mxu0 0
    %2104 = vmatpush1.bf16.msra.mxu0 0
    %2105 = vmatprep.subr.bf16.mxu0 0
    %2106 = vmatpush1.bf16.msra.mxu0 0
    %2107 = vmatprep.subr.bf16.mxu0 0
    %2108 = vmatpush1.bf16.msra.mxu0 0
    %2109 = vmatprep.subr.bf16.mxu0 0
    %2110 = vmatpush1.bf16.msra.mxu0 0
    %2111 = vmatprep.subr.bf16.mxu0 0
    %2112 = vmatpush1.bf16.msra.mxu0 0
    %2113 = vmatprep.subr.bf16.mxu0 0
    %2114 = vmatpush1.bf16.msra.mxu0 0
    %2115 = vmatprep.subr.bf16.mxu0 0
    %2116 = vmatpush1.bf16.msra.mxu0 0
    %2117 = vmatprep.subr.bf16.mxu0 0
    %2118 = vmatpush1.bf16.msra.mxu0 0
    %2119 = vmatprep.subr.bf16.mxu0 0
    %2120 = vmatpush1.bf16.msra.mxu0 0
    %2121 = vmatprep.subr.bf16.mxu0 0
    %2122 = vmatpush1.bf16.msra.mxu0 0
    %2123 = vmatprep.subr.bf16.mxu0 0
    %2124 = vmatpush1.bf16.msra.mxu0 0
    %2125 = vmatprep.mubr.bf16.mxu0 0
    %2126 = vmatmul.mubr.bf16.gmra.mrb[0].mxu0 %v2091
    %v2127 = vpop.f32.mrb[0].mxu0
    %v2128 = vadd.f32 0.0, %v2127
    %v2129 = vpop.f32.mrb[0].mxu0
    %v2130 = vpop.f32.mrb[0].mxu0
    %v2131 = vpop.f32.mrb[0].mxu0
    %2132 = vdwg.mxu0
    %v2133 = vadd.f32 %v1995, %v2128
    %v2134 = vtanh.pop %v2133
    %v2135 = vadd.f32 %v2042, %v2088
    %v2136 = vmul.f32 %v2135, 2.0
    %v2137 = vadd.f32 %v1996, %v2136
    %v2138 = vadd.f32 %v2137, %v2134
    %v2139 = vadd.f32 %v1948, %v2138
    %v2141 = vsel %vm230, %v2139, 0
    %2143 = vmatprep.subr.mxu0 0.0
    %2144 = vmatpush1.msra.mxu0 %v68
    %2145 = vmatprep.subr.mxu0 0.0
    %2146 = vmatpush1.msra.mxu0 %v69
    %2147 = vmatprep.subr.mxu0 0.0
    %2148 = vmatpush1.msra.mxu0 %v70
    %2149 = vmatprep.subr.mxu0 0.0
    %2150 = vmatpush1.msra.mxu0 %v71
    %2151 = vmatprep.subr.mxu0 0.0
    %2152 = vmatpush1.msra.mxu0 %v72
    %2153 = vmatprep.subr.mxu0 0.0
    %2154 = vmatpush1.msra.mxu0 %v73
    %2155 = vmatprep.subr.mxu0 0.0
    %2156 = vmatpush1.msra.mxu0 %v74
    %2157 = vmatprep.subr.mxu0 0.0
    %2158 = vmatpush1.msra.mxu0 %v75
    %2159 = vmatprep.subr.mxu0 0.0
    %2160 = vmatpush1.msra.mxu0 0.0
    %2161 = vmatprep.subr.mxu0 0.0
    %2162 = vmatpush1.msra.mxu0 0.0
    %2163 = vmatprep.subr.mxu0 0.0
    %2164 = vmatpush1.msra.mxu0 0.0
    %2165 = vmatprep.subr.mxu0 0.0
    %2166 = vmatpush1.msra.mxu0 0.0
    %2167 = vmatprep.subr.mxu0 0.0
    %2168 = vmatpush1.msra.mxu0 0.0
    %2169 = vmatprep.subr.mxu0 0.0
    %2170 = vmatpush1.msra.mxu0 0.0
    %2171 = vmatprep.subr.mxu0 0.0
    %2172 = vmatpush1.msra.mxu0 0.0
    %2173 = vmatprep.subr.mxu0 0.0
    %2174 = vmatpush1.msra.mxu0 0.0
    %2175 = vmatprep.subr.mxu0 0.0
    %2176 = vmatpush1.msra.mxu0 0.0
    %2177 = vmatprep.subr.mxu0 0.0
    %2178 = vmatpush1.msra.mxu0 0.0
    %2179 = vmatprep.subr.mxu0 0.0
    %2180 = vmatpush1.msra.mxu0 0.0
    %2181 = vmatprep.subr.mxu0 0.0
    %2182 = vmatpush1.msra.mxu0 0.0
    %2183 = vmatprep.subr.mxu0 0.0
    %2184 = vmatpush1.msra.mxu0 0.0
    %2185 = vmatprep.subr.mxu0 0.0
    %2186 = vmatpush1.msra.mxu0 0.0
    %2187 = vmatprep.subr.mxu0 0.0
    %2188 = vmatpush1.msra.mxu0 0.0
    %2189 = vmatprep.subr.mxu0 0.0
    %2190 = vmatpush1.msra.mxu0 0.0
    %2191 = vmatprep.subr.mxu0 0.0
    %2192 = vmatpush1.msra.mxu0 0.0
    %2193 = vmatprep.subr.mxu0 0.0
    %2194 = vmatpush1.msra.mxu0 0.0
    %2195 = vmatprep.subr.mxu0 0.0
    %2196 = vmatpush1.msra.mxu0 0.0
    %2197 = vmatprep.subr.mxu0 0.0
    %2198 = vmatpush1.msra.mxu0 0.0
    %2199 = vmatprep.subr.mxu0 0.0
    %2200 = vmatpush1.msra.mxu0 0.0
    %2201 = vmatprep.subr.mxu0 0.0
    %2202 = vmatpush1.msra.mxu0 0.0
    %2203 = vmatprep.subr.mxu0 0.0
    %2204 = vmatpush1.msra.mxu0 0.0
    %2205 = vmatprep.subr.mxu0 0.0
    %2206 = vmatpush1.msra.mxu0 0.0
    %2207 = vmatprep.mubr.f32.mxu0 0.0
    %2208 = vmatmul.mubr.f32.gmra.mrb[0].mxu0 %v2141
    %v2209 = vpop.f32.mrb[0].mxu0
    %v2210 = vadd.f32 0.0, %v2209
    %v2211 = vpop.f32.mrb[0].mxu0
    %2212 = vdwg.mxu0
    %v2213 = vadd.f32 %v63, %v2210
    %v2214 = vadd.f32 %v2213, %v126
    %2215 = vst.msk [vmem:[#allocation7] sm:$0xff] %vm128, %v2214
    // Predicated region
    $region50: #{tpu_custom_call.1} parent=1 // pred_check
      _
    $region51: #{tpu_custom_call.1} parent=1 // pred_check_branch
      %2217 = sbr.rel (0) target = $region53
    $region52: #{tpu_custom_call.1} parent=1 // pred_region
      %s2219 = ssub.s32 128, 128
      %2220 = vsyncadd [#allocation4], %s2219
      %s2222 = sshll.u32 [#allocation7], 4
      %s2223 = int_to_ptr.vmem [resolvable:$true] %s2222
      %2225 = dma.vmem_to_hbm [thread:$0]  %s2223, 128, %s10, [#allocation4]
    $region53: #{tpu_custom_call.1} parent=1 // pred_fallthru
      _
    // Predicated region
    $region54: #{tpu_custom_call.1} parent=1 // pred_check
      _
    $region55: #{tpu_custom_call.1} parent=1 // pred_check_branch
      %2227 = sbr.rel (0) target = $region57
    $region56: #{tpu_custom_call.1} parent=1 // pred_region
      %2228 = dma.done [#allocation4], 128
    $region57: #{tpu_custom_call.1} parent=1 // pred_fallthru
      _
    %2229 = vsyncpa [#allocation3], 1
    %2230 = vsyncpa [#allocation6], 1
    %2231 = vsyncpa [#allocation4], 1

</llo_original>
